<compile_context>
chip_gen: v5e
topology: v5e:2x2
jax: 0.10.0
libtpu: 0.0.40
codegen_flags: <defaults>
</compile_context>

<pallas_src>
import functools

import jax
import jax.numpy as jnp
from jax.experimental import pallas as pl
from jax.experimental.pallas import tpu as pltpu

BN_EPS = 1e-5


def _round_up(x, m):
    return ((x + m - 1) // m) * m


def _vmem_capacity_bytes():
    # Physical VMEM per TensorCore; gates w2 residency (v7x: 64 MiB/TC,
    # v5e/v6e: 128 MiB).  Fall back to the smallest (v7x) if unavailable.
    try:
        return int(pltpu.get_tpu_info().vmem_capacity_bytes)
    except Exception:
        return 64 * 1024 * 1024


# ----------------------------------------------------------------------------
# Kernels
# ----------------------------------------------------------------------------
def _head_resident_kernel(p_ref, wp_ref, bp_ref, w1_ref, b1_ref,
                          w2_ref, b2_ref, logits_ref, feats_ref):
    """grid = (num_batch_tiles,).  All weights have constant index maps, so the
    BlockSpec pipeline fetches them exactly once; w2 stays resident in VMEM."""
    # surrogate backbone projection (global mean-pool is done in the wrapper)
    feat = (jnp.dot(p_ref[...].astype(jnp.bfloat16), wp_ref[...],
                    preferred_element_type=jnp.float32) + bp_ref[...])
    # mix_prec: features.float() -> f32 accumulation.
    # add_block: Linear + eval-mode BatchNorm folded into (w1, b1); Dropout = id
    h = (jnp.dot(feat.astype(jnp.bfloat16), w1_ref[...],
                 preferred_element_type=jnp.float32) + b1_ref[...])
    feats_ref[...] = h
    # classifier over the full lane-dense padded class dim (w2 VMEM-resident)
    logits_ref[...] = (jnp.dot(h.astype(jnp.bfloat16), w2_ref[...],
                               preferred_element_type=jnp.float32) + b2_ref[...])


def _head_tiled_kernel(p_ref, wp_ref, bp_ref, w1_ref, b1_ref,
                       w2_ref, b2_ref, logits_ref, feats_ref, hbf_ref):
    """grid = (num_batch_tiles, num_class_tiles); j (class tiles) is the inner
    'arbitrary' axis.  h is computed once per batch tile at j == 0 and kept in
    a bf16 VMEM scratch for every class tile."""
    j = pl.program_id(1)

    @pl.when(j == 0)
    def _():
        feat = (jnp.dot(p_ref[...].astype(jnp.bfloat16), wp_ref[...],
                        preferred_element_type=jnp.float32) + bp_ref[...])
        h = (jnp.dot(feat.astype(jnp.bfloat16), w1_ref[...],
                     preferred_element_type=jnp.float32) + b1_ref[...])
        feats_ref[...] = h
        hbf_ref[...] = h.astype(jnp.bfloat16)

    logits_ref[...] = (jnp.dot(hbf_ref[...], w2_ref[...],
                               preferred_element_type=jnp.float32) + b2_ref[...])


# ----------------------------------------------------------------------------
# VMEM footprint estimates (blocked operands are double-buffered by the
# BlockSpec pipeline even when their index map is constant).
# ----------------------------------------------------------------------------
def _resident_vmem_bytes(tm, c, bd, l_dim, c_pad):
    weights = 2 * (c * bd * 2 + bd * 4 + bd * l_dim * 2 + l_dim * 4
                   + l_dim * c_pad * 2 + c_pad * 4)
    blocks = 2 * (tm * c * 4 + tm * c_pad * 4 + tm * l_dim * 4)
    live = tm * (bd + l_dim) * 4 + tm * max(l_dim, c_pad) * 2
    return weights + blocks + live


def _tiled_vmem_bytes(tm, c, bd, l_dim, tn):
    const = 2 * (c * bd * 2 + bd * 4 + bd * l_dim * 2 + l_dim * 4)
    w2 = 2 * (l_dim * tn * 2 + tn * 4)
    blocks = 2 * (tm * c * 4 + tm * tn * 4 + tm * l_dim * 4)
    scratch = tm * l_dim * 2
    live = tm * (bd + l_dim) * 4
    return const + w2 + blocks + scratch + live


# ----------------------------------------------------------------------------
# Parameter prep: fold eval-BN into (w1, b1), cast big weights to bf16,
# pad the class dim to a multiple of 128 (lane-dense logits).
# ----------------------------------------------------------------------------
def prepare_params(params, class_num):
    inv_std = jax.lax.rsqrt(params["bn_var"] + BN_EPS)
    scale = params["bn_gamma"] * inv_std                           # [1, L]
    w1f = (params["w1"] * scale).astype(jnp.bfloat16)
    b1f = (params["b1"] - params["bn_mean"]) * scale + params["bn_beta"]

    wp = params["wp"].astype(jnp.bfloat16)
    bp = params["bp"]

    c_pad = _round_up(class_num, 128)
    pad_c = c_pad - class_num
    w2 = jnp.pad(params["w2"], ((0, 0), (0, pad_c))).astype(jnp.bfloat16)
    b2 = jnp.pad(params["b2"], ((0, 0), (0, pad_c)))

    return dict(wp=wp, bp=bp, w1=w1f, b1=b1f, w2=w2, b2=b2)


# ----------------------------------------------------------------------------
# Wrapper
# ----------------------------------------------------------------------------
@functools.partial(jax.jit, static_argnames=("class_num", "force_tiled"))
def effnetv2_forward(x_nchw, prep, *, class_num, force_tiled=False):
    n, c, h, w = x_nchw.shape
    bd = prep["wp"].shape[1]          # 1280
    l_dim = prep["w1"].shape[1]       # linear (features_dim)
    c_pad = prep["w2"].shape[1]       # padded class_num (multiple of 128)

    # surrogate backbone pooling in the wrapper (cheap, removes the per-tile
    # XLU reduce and the large f32 x DMA from the kernel)
    pooled = jnp.mean(x_nchw.reshape(n, c, h * w), axis=-1)        # [N, C] f32

    # batch tile: 256 fills the 256-wide MXU M dim on v6e/v7x, 128 keeps v5e
    # granularity; small batches round up to bf16 sublane packing (16 rows).
    if n >= 256:
        tm = 256
    elif n >= 128:
        tm = 128
    else:
        tm = _round_up(max(n, 1), 16)
    n_pad = _round_up(n, tm)
    # a lone batch tile leaves one v7x TensorCore idle -> split it in two
    if n_pad // tm == 1 and tm % 32 == 0:
        tm //= 2

    if n_pad != n:
        pooled = jnp.pad(pooled, ((0, n_pad - n), (0, 0)))

    cap = _vmem_capacity_bytes()
    budget = (cap * 3) // 4           # leave headroom for compiler scratch
    use_resident = (not force_tiled) and (
        _resident_vmem_bytes(tm, c, bd, l_dim, c_pad) + (4 << 20) <= budget)

    n_tiles = n_pad // tm
    flops = 2 * n_pad * (c * bd + bd * l_dim + l_dim * c_pad)
    const_w_bytes = c * bd * 2 + bd * 4 + bd * l_dim * 2 + l_dim * 4
    in_bytes = n_pad * c * 4

    if use_resident:
        need = _resident_vmem_bytes(tm, c, bd, l_dim, c_pad)
        vmem_limit = int(min(budget, max(need + (8 << 20), 32 << 20)))
        bytes_accessed = (in_bytes + const_w_bytes
                          + l_dim * c_pad * 2 + c_pad * 4        # w2/b2 once
                          + n_pad * (c_pad + l_dim) * 4)

        logits, feats = pl.pallas_call(
            _head_resident_kernel,
            out_shape=(
                jax.ShapeDtypeStruct((n_pad, c_pad), jnp.float32),
                jax.ShapeDtypeStruct((n_pad, l_dim), jnp.float32),
            ),
            grid_spec=pltpu.PrefetchScalarGridSpec(
                num_scalar_prefetch=0,
                grid=(n_tiles,),
                in_specs=[
                    pl.BlockSpec((tm, c), lambda i: (i, 0)),        # pooled
                    pl.BlockSpec((c, bd), lambda i: (0, 0)),        # wp (bf16)
                    pl.BlockSpec((1, bd), lambda i: (0, 0)),        # bp
                    pl.BlockSpec((bd, l_dim), lambda i: (0, 0)),    # w1 folded
                    pl.BlockSpec((1, l_dim), lambda i: (0, 0)),     # b1 folded
                    pl.BlockSpec((l_dim, c_pad), lambda i: (0, 0)), # w2 resident
                    pl.BlockSpec((1, c_pad), lambda i: (0, 0)),     # b2
                ],
                out_specs=(
                    pl.BlockSpec((tm, c_pad), lambda i: (i, 0)),    # logits
                    pl.BlockSpec((tm, l_dim), lambda i: (i, 0)),    # feats
                ),
            ),
            compiler_params=pltpu.CompilerParams(
                dimension_semantics=("parallel",),
                vmem_limit_bytes=vmem_limit,
            ),
            cost_estimate=pl.CostEstimate(
                flops=flops, transcendentals=0, bytes_accessed=bytes_accessed),
        )(pooled, prep["wp"], prep["bp"], prep["w1"], prep["b1"],
          prep["w2"], prep["b2"])

        return logits[:n, :class_num], feats[:n]

    # ---- fallback: class-tiled path (w2 does not fit the VMEM budget) ----
    # pick the largest lane-dense class tile whose extra padding stays small
    tn = 128
    for t in (1024, 512, 256, 128):
        if t <= c_pad and (_round_up(c_pad, t) - c_pad) * 8 <= c_pad:
            tn = t
            break
    c_pad_t = _round_up(c_pad, tn)
    w2 = prep["w2"]
    b2 = prep["b2"]
    if c_pad_t != c_pad:
        w2 = jnp.pad(w2, ((0, 0), (0, c_pad_t - c_pad)))
        b2 = jnp.pad(b2, ((0, 0), (0, c_pad_t - c_pad)))

    need = _tiled_vmem_bytes(tm, c, bd, l_dim, tn)
    vmem_limit = int(min(budget, max(need + (8 << 20), 32 << 20)))
    # honest hint: w2/b2 are re-streamed once per batch tile in this path
    bytes_accessed = (in_bytes + const_w_bytes
                      + n_tiles * (l_dim * c_pad_t * 2 + c_pad_t * 4)
                      + n_pad * (c_pad_t + l_dim) * 4)

    logits, feats = pl.pallas_call(
        _head_tiled_kernel,
        out_shape=(
            jax.ShapeDtypeStruct((n_pad, c_pad_t), jnp.float32),
            jax.ShapeDtypeStruct((n_pad, l_dim), jnp.float32),
        ),
        grid_spec=pltpu.PrefetchScalarGridSpec(
            num_scalar_prefetch=0,
            grid=(n_tiles, c_pad_t // tn),
            in_specs=[
                pl.BlockSpec((tm, c), lambda i, j: (i, 0)),         # pooled
                pl.BlockSpec((c, bd), lambda i, j: (0, 0)),         # wp (bf16)
                pl.BlockSpec((1, bd), lambda i, j: (0, 0)),         # bp
                pl.BlockSpec((bd, l_dim), lambda i, j: (0, 0)),     # w1 folded
                pl.BlockSpec((1, l_dim), lambda i, j: (0, 0)),      # b1 folded
                pl.BlockSpec((l_dim, tn), lambda i, j: (0, j)),     # w2 tile
                pl.BlockSpec((1, tn), lambda i, j: (0, j)),         # b2 tile
            ],
            out_specs=(
                pl.BlockSpec((tm, tn), lambda i, j: (i, j)),        # logits
                pl.BlockSpec((tm, l_dim), lambda i, j: (i, 0)),     # feats (resident over j)
            ),
            scratch_shapes=[pltpu.VMEM((tm, l_dim), jnp.bfloat16)],
        ),
        compiler_params=pltpu.CompilerParams(
            dimension_semantics=("parallel", "arbitrary"),
            vmem_limit_bytes=vmem_limit,
        ),
        cost_estimate=pl.CostEstimate(
            flops=flops, transcendentals=0, bytes_accessed=bytes_accessed),
    )(pooled, prep["wp"], prep["bp"], prep["w1"], prep["b1"], w2, b2)

    return logits[:n, :class_num], feats[:n]


# ----------------------------------------------------------------------------
# Deterministic parameter init (mirrors the PyTorch init functions)
# ----------------------------------------------------------------------------
def init_params(key, in_channels, backbone_dim, linear, class_num):
    k_wp, k_w1, k_g, k_w2 = jax.random.split(key, 4)

    # surrogate backbone projection: kaiming fan_in (Conv-style init)
    wp = jax.random.normal(k_wp, (in_channels, backbone_dim), jnp.float32) * (
        2.0 / in_channels
    ) ** 0.5
    bp = jnp.zeros((1, backbone_dim), jnp.float32)

    # add_block Linear(1280 -> linear): kaiming_normal_, mode='fan_out'
    # (PyTorch weight is [out, in]; stored transposed here as [in, out])
    w1 = jax.random.normal(k_w1, (backbone_dim, linear), jnp.float32) * (
        2.0 / linear
    ) ** 0.5
    b1 = jnp.zeros((1, linear), jnp.float32)

    # BatchNorm1d(linear): gamma ~ N(1, 0.02), beta = 0, running stats (0, 1)
    bn_gamma = 1.0 + 0.02 * jax.random.normal(k_g, (1, linear), jnp.float32)
    bn_beta = jnp.zeros((1, linear), jnp.float32)
    bn_mean = jnp.zeros((1, linear), jnp.float32)
    bn_var = jnp.ones((1, linear), jnp.float32)

    # classifier Linear(linear -> class_num): weight ~ N(0, 0.001), bias = 0
    w2 = 0.001 * jax.random.normal(k_w2, (linear, class_num), jnp.float32)
    b2 = jnp.zeros((1, class_num), jnp.float32)

    return dict(
        wp=wp, bp=bp,
        w1=w1, b1=b1,
        bn_gamma=bn_gamma, bn_beta=bn_beta, bn_mean=bn_mean, bn_var=bn_var,
        w2=w2, b2=b2,
    )


# ----------------------------------------------------------------------------
# Pure-JAX f32 reference (PyTorch semantics, eval mode)
# ----------------------------------------------------------------------------
def reference_forward(x_nchw, params):
    n, c, h, w = x_nchw.shape
    pooled = jnp.mean(x_nchw.reshape(n, c, h * w), axis=-1)
    feat = pooled @ params["wp"] + params["bp"]
    hdn = feat @ params["w1"] + params["b1"]
    inv_std = jax.lax.rsqrt(params["bn_var"] + BN_EPS)
    hdn = (hdn - params["bn_mean"]) * inv_std * params["bn_gamma"] + params["bn_beta"]
    logits = hdn @ params["w2"] + params["b2"]
    return logits, hdn


# ----------------------------------------------------------------------------
# Main
# ----------------------------------------------------------------------------
if __name__ == "__main__":
    # Small shapes consistent with the module's forward:
    #   x: [N, C, H, W]; backbone feature dim = 1280 (ClassBlock input_dim);
    #   linear / class_num scaled down from (2048, 5540).
    N, C, H, W = 2, 4, 16, 16
    BACKBONE_DIM = 1280
    LINEAR = 256
    CLASS_NUM = 64

    key = jax.random.PRNGKey(0)
    k_x, k_p = jax.random.split(key)
    x = jax.random.normal(k_x, (N, C, H, W), jnp.float32)
    params = init_params(k_p, C, BACKBONE_DIM, LINEAR, CLASS_NUM)
    prep = prepare_params(params, CLASS_NUM)

    ref_logits, ref_feats = reference_forward(x, params)

    # Path A: w2 fully VMEM-resident (chosen automatically at these shapes)
    logits, features = effnetv2_forward(x, prep, class_num=CLASS_NUM)
    jax.block_until_ready((logits, features))
    assert logits.shape == (N, CLASS_NUM), logits.shape
    assert features.shape == (N, LINEAR), features.shape
    assert logits.dtype == jnp.float32 and features.dtype == jnp.float32
    # loose tolerance: weights are held in bf16 inside the kernel
    assert jnp.allclose(features, ref_feats, atol=3e-2, rtol=3e-1), float(
        jnp.max(jnp.abs(features - ref_feats)))
    assert jnp.allclose(logits, ref_logits, atol=3e-2, rtol=3e-1), float(
        jnp.max(jnp.abs(logits - ref_logits)))

    # Path B: class-tiled fallback (used when w2 exceeds the VMEM budget,
    # e.g. huge class_num on v7x's 64 MiB/TC) — exercised here for coverage.
    logits_t, features_t = effnetv2_forward(
        x, prep, class_num=CLASS_NUM, force_tiled=True)
    jax.block_until_ready((logits_t, features_t))
    assert jnp.allclose(features_t, ref_feats, atol=3e-2, rtol=3e-1), float(
        jnp.max(jnp.abs(features_t - ref_feats)))
    assert jnp.allclose(logits_t, ref_logits, atol=3e-2, rtol=3e-1), float(
        jnp.max(jnp.abs(logits_t - ref_logits)))

    print("KERNEL_OK")
</pallas_src>

<mosaic_0001>
module attributes {stable_mosaic.version = 11 : i64} {
  func.func @_head_resident_kernel(%arg0: i32, %arg1: memref<16x4xf32, #tpu.memory_space<vmem>>, %arg2: memref<4x1280xbf16, #tpu.memory_space<vmem>>, %arg3: memref<1x1280xf32, #tpu.memory_space<vmem>>, %arg4: memref<1280x256xbf16, #tpu.memory_space<vmem>>, %arg5: memref<1x256xf32, #tpu.memory_space<vmem>>, %arg6: memref<256x128xbf16, #tpu.memory_space<vmem>>, %arg7: memref<1x128xf32, #tpu.memory_space<vmem>>, %arg8: memref<16x128xf32, #tpu.memory_space<vmem>>, %arg9: memref<16x256xf32, #tpu.memory_space<vmem>>) attributes {dimension_semantics = [#tpu.dimension_semantics<parallel>], iteration_bounds = array<i64: 1>, scalar_prefetch = 0 : i64, scratch_operands = 0 : i64, tpu.core_type = #tpu.core_type<tc>, window_params = [{transform_indices = @transform_0, window_bounds = array<i64: 16, 4>}, {pipeline_mode = #tpu.pipeline_mode<synchronous>, transform_indices = @transform_1, window_bounds = array<i64: 4, 1280>}, {pipeline_mode = #tpu.pipeline_mode<synchronous>, transform_indices = @transform_2, window_bounds = array<i64: 1, 1280>}, {pipeline_mode = #tpu.pipeline_mode<synchronous>, transform_indices = @transform_3, window_bounds = array<i64: 1280, 256>}, {pipeline_mode = #tpu.pipeline_mode<synchronous>, transform_indices = @transform_4, window_bounds = array<i64: 1, 256>}, {pipeline_mode = #tpu.pipeline_mode<synchronous>, transform_indices = @transform_5, window_bounds = array<i64: 256, 128>}, {pipeline_mode = #tpu.pipeline_mode<synchronous>, transform_indices = @transform_6, window_bounds = array<i64: 1, 128>}, {transform_indices = @transform_7, window_bounds = array<i64: 16, 128>}, {transform_indices = @transform_8, window_bounds = array<i64: 16, 256>}]} {
    %c0 = arith.constant 0 : index
    %c0_0 = arith.constant 0 : index
    %0 = vector.load %arg1[%c0, %c0_0] : memref<16x4xf32, #tpu.memory_space<vmem>>, vector<16x4xf32>
    %1 = arith.truncf %0 : vector<16x4xf32> to vector<16x4xbf16>
    %c0_1 = arith.constant 0 : index
    %c0_2 = arith.constant 0 : index
    %2 = vector.load %arg2[%c0_1, %c0_2] : memref<4x1280xbf16, #tpu.memory_space<vmem>>, vector<4x1280xbf16>
    %cst = arith.constant dense<0.000000e+00> : vector<16x1280xf32>
    %3 = tpu.matmul %1, %2, %cst {dimension_numbers = #tpu.dot_dimension_numbers<[1], [0], [0], [1], [0, 0, 1, 1], [], []>} : vector<16x4xbf16>, vector<4x1280xbf16>, vector<16x1280xf32> -> vector<16x1280xf32>
    %c0_3 = arith.constant 0 : index
    %c0_4 = arith.constant 0 : index
    %4 = vector.load %arg3[%c0_3, %c0_4] : memref<1x1280xf32, #tpu.memory_space<vmem>>, vector<1x1280xf32>
    %5 = vector.broadcast %4 : vector<1x1280xf32> to vector<16x1280xf32>
    %6 = arith.addf %3, %5 : vector<16x1280xf32>
    %7 = arith.truncf %6 : vector<16x1280xf32> to vector<16x1280xbf16>
    %c0_5 = arith.constant 0 : index
    %c0_6 = arith.constant 0 : index
    %8 = vector.load %arg4[%c0_5, %c0_6] : memref<1280x256xbf16, #tpu.memory_space<vmem>>, vector<1280x256xbf16>
    %cst_7 = arith.constant dense<0.000000e+00> : vector<16x256xf32>
    %9 = tpu.matmul %7, %8, %cst_7 {dimension_numbers = #tpu.dot_dimension_numbers<[1], [0], [0], [1], [0, 0, 1, 1], [], []>} : vector<16x1280xbf16>, vector<1280x256xbf16>, vector<16x256xf32> -> vector<16x256xf32>
    %c0_8 = arith.constant 0 : index
    %c0_9 = arith.constant 0 : index
    %10 = vector.load %arg5[%c0_8, %c0_9] : memref<1x256xf32, #tpu.memory_space<vmem>>, vector<1x256xf32>
    %11 = vector.broadcast %10 : vector<1x256xf32> to vector<16x256xf32>
    %12 = arith.addf %9, %11 : vector<16x256xf32>
    %c0_10 = arith.constant 0 : index
    %c0_11 = arith.constant 0 : index
    %13 = vector.load %arg9[%c0_10, %c0_11] : memref<16x256xf32, #tpu.memory_space<vmem>>, vector<16x256xf32>
    tpu.vector_store %arg9[%c0_10, %c0_11], %12 {strides = array<i32>} : memref<16x256xf32, #tpu.memory_space<vmem>>, vector<16x256xf32>,
    %14 = arith.truncf %12 : vector<16x256xf32> to vector<16x256xbf16>
    %c0_12 = arith.constant 0 : index
    %c0_13 = arith.constant 0 : index
    %15 = vector.load %arg6[%c0_12, %c0_13] : memref<256x128xbf16, #tpu.memory_space<vmem>>, vector<256x128xbf16>
    %cst_14 = arith.constant dense<0.000000e+00> : vector<16x128xf32>
    %16 = tpu.matmul %14, %15, %cst_14 {dimension_numbers = #tpu.dot_dimension_numbers<[1], [0], [0], [1], [0, 0, 1, 1], [], []>} : vector<16x256xbf16>, vector<256x128xbf16>, vector<16x128xf32> -> vector<16x128xf32>
    %c0_15 = arith.constant 0 : index
    %c0_16 = arith.constant 0 : index
    %17 = vector.load %arg7[%c0_15, %c0_16] : memref<1x128xf32, #tpu.memory_space<vmem>>, vector<1x128xf32>
    %18 = vector.broadcast %17 : vector<1x128xf32> to vector<16x128xf32>
    %19 = arith.addf %16, %18 : vector<16x128xf32>
    %c0_17 = arith.constant 0 : index
    %c0_18 = arith.constant 0 : index
    %20 = vector.load %arg8[%c0_17, %c0_18] : memref<16x128xf32, #tpu.memory_space<vmem>>, vector<16x128xf32>
    tpu.vector_store %arg8[%c0_17, %c0_18], %19 {strides = array<i32>} : memref<16x128xf32, #tpu.memory_space<vmem>>, vector<16x128xf32>,
    return
  }
  func.func @transform_0(%arg0: i32) -> (i32, i32) {
    %c0_i32 = arith.constant 0 : i32
    %c0_i32_0 = arith.constant 0 : i32
    return %arg0, %c0_i32 : i32, i32
  }
  func.func @transform_1(%arg0: i32) -> (i32, i32) {
    %c0_i32 = arith.constant 0 : i32
    %c0_i32_0 = arith.constant 0 : i32
    %c0_i32_1 = arith.constant 0 : i32
    return %c0_i32, %c0_i32_0 : i32, i32
  }
  func.func @transform_2(%arg0: i32) -> (i32, i32) {
    %c0_i32 = arith.constant 0 : i32
    %c0_i32_0 = arith.constant 0 : i32
    %c0_i32_1 = arith.constant 0 : i32
    return %c0_i32, %c0_i32_0 : i32, i32
  }
  func.func @transform_3(%arg0: i32) -> (i32, i32) {
    %c0_i32 = arith.constant 0 : i32
    %c0_i32_0 = arith.constant 0 : i32
    %c0_i32_1 = arith.constant 0 : i32
    return %c0_i32, %c0_i32_0 : i32, i32
  }
  func.func @transform_4(%arg0: i32) -> (i32, i32) {
    %c0_i32 = arith.constant 0 : i32
    %c0_i32_0 = arith.constant 0 : i32
    %c0_i32_1 = arith.constant 0 : i32
    return %c0_i32, %c0_i32_0 : i32, i32
  }
  func.func @transform_5(%arg0: i32) -> (i32, i32) {
    %c0_i32 = arith.constant 0 : i32
    %c0_i32_0 = arith.constant 0 : i32
    %c0_i32_1 = arith.constant 0 : i32
    return %c0_i32, %c0_i32_0 : i32, i32
  }
  func.func @transform_6(%arg0: i32) -> (i32, i32) {
    %c0_i32 = arith.constant 0 : i32
    %c0_i32_0 = arith.constant 0 : i32
    %c0_i32_1 = arith.constant 0 : i32
    return %c0_i32, %c0_i32_0 : i32, i32
  }
  func.func @transform_7(%arg0: i32) -> (i32, i32) {
    %c0_i32 = arith.constant 0 : i32
    %c0_i32_0 = arith.constant 0 : i32
    return %arg0, %c0_i32 : i32, i32
  }
  func.func @transform_8(%arg0: i32) -> (i32, i32) {
    %c0_i32 = arith.constant 0 : i32
    %c0_i32_0 = arith.constant 0 : i32
    return %arg0, %c0_i32 : i32, i32
  }
}

</mosaic_0001>

<llo_original>
// kernel: effnetv2_forward.1
$region0: #{effnetv2_forward.1}
  #allocation0 [shape = 'u32[]', space=smem, size = 0x4, offset = 0x4, fixed_abs, tag = 'smem constant byte address 0x4 - core index']
  #allocation1 [shape = 'u32[72,128]{1,0:T(1,128)}', space=vmem, size = 0x9000, scoped, tag = 'internal scratch']
  %s0 = inlined_call_operand.vmem [shape: f32[16,4], index: 0, kind: input, shape index: {}]
  %s1 = inlined_call_operand.vmem [shape: bf16[4,1280], index: 1, kind: input, shape index: {}]
  %s2 = inlined_call_operand.vmem [shape: f32[1,1280], index: 2, kind: input, shape index: {}]
  %s3 = inlined_call_operand.hbm [shape: bf16[1280,256], index: 3, kind: input, shape index: {}]
  %s4 = inlined_call_operand.hbm [shape: f32[1,256], index: 4, kind: input, shape index: {}]
  %s5 = inlined_call_operand.vmem [shape: bf16[256,128], index: 5, kind: input, shape index: {}]
  %s6 = inlined_call_operand.hbm [shape: f32[1,128], index: 6, kind: input, shape index: {}]
  %s7 = inlined_call_operand.vmem [shape: f32[16,128], index: 7, kind: output, shape index: {0}]
  %s8 = inlined_call_operand.vmem [shape: f32[16,256], index: 8, kind: output, shape index: {1}]
  %9 = xla_tuple %s7, %s8
  %s10 = sld [smem:[#allocation0]]
  $region58: #{effnetv2_forward.1} parent=0
    _
  %s12 = ssub.s32 1, %s10
  %s13 = scalar_select 0, %s12, %s10
  $region1: #{effnetv2_forward.1} parent=0
    #allocation2 [shape = 'u8[655360]{0}', space=vmem, size = 0xa0000, scoped, tag = 'input window, operand 3, single buffered']
    #allocation3 [shape = 's32[1]{0}', space=sflag, size = 0x4, scoped, tag = 'scoped memory for effnetv2_forward.1']
    #allocation4 [shape = 'u8[1024]{0}', space=vmem, size = 0x400, scoped, tag = 'input window, operand 4, single buffered']
    #allocation5 [shape = 's32[1]{0}', space=sflag, size = 0x4, scoped, tag = 'scoped memory for effnetv2_forward.1']
    #allocation6 [shape = 'u8[512]{0}', space=vmem, size = 0x400, scoped, tag = 'input window, operand 6, single buffered']
    %14 = vsyncpa [#allocation3], 0
    %15 = vsyncpa [#allocation5], 0
    // Predicated region
    $region2: #{effnetv2_forward.1} parent=1 // pred_check
      _
    $region3: #{effnetv2_forward.1} parent=1 // pred_check_branch
      %17 = sbr.rel (0) target = $region5
    $region4: #{effnetv2_forward.1} parent=1 // pred_region
      _
    $region5: #{effnetv2_forward.1} parent=1 // pred_fallthru
      _
    // Predicated region
    $region6: #{effnetv2_forward.1} parent=1 // pred_check
      _
    $region7: #{effnetv2_forward.1} parent=1 // pred_check_branch
      %19 = sbr.rel (0) target = $region9
    $region8: #{effnetv2_forward.1} parent=1 // pred_region
      _
    $region9: #{effnetv2_forward.1} parent=1 // pred_fallthru
      _
    // Predicated region
    $region10: #{effnetv2_forward.1} parent=1 // pred_check
      _
    $region11: #{effnetv2_forward.1} parent=1 // pred_check_branch
      %21 = sbr.rel (0) target = $region13
    $region12: #{effnetv2_forward.1} parent=1 // pred_region
      _
    $region13: #{effnetv2_forward.1} parent=1 // pred_fallthru
      _
    // Predicated region
    $region14: #{effnetv2_forward.1} parent=1 // pred_check
      _
    $region15: #{effnetv2_forward.1} parent=1 // pred_check_branch
      %23 = sbr.rel (0) target = $region17
    $region16: #{effnetv2_forward.1} parent=1 // pred_region
      %25 = vsyncadd [#allocation3], 0
      %s26 = sshll.u32 %s3, 4
      %s27 = int_to_ptr.hbm [resolvable:$true] %s26
      %s28 = sshll.u32 [#allocation2], 4
      %s29 = int_to_ptr.vmem [resolvable:$true] %s28
      %34 = dma.hbm_to_vmem [thread:$0]  %s27, 20480, %s29, [#allocation3], 128, 128, 8
    $region17: #{effnetv2_forward.1} parent=1 // pred_fallthru
      _
    // Predicated region
    $region18: #{effnetv2_forward.1} parent=1 // pred_check
      _
    $region19: #{effnetv2_forward.1} parent=1 // pred_check_branch
      %36 = sbr.rel (0) target = $region21
    $region20: #{effnetv2_forward.1} parent=1 // pred_region
      %38 = vsyncadd [#allocation5], 0
      %s40 = sshll.u32 %s4, 4
      %s41 = int_to_ptr.hbm [resolvable:$true] %s40
      %s42 = sshll.u32 [#allocation4], 4
      %s43 = int_to_ptr.vmem [resolvable:$true] %s42
      %45 = dma.hbm_to_vmem [thread:$0]  %s41, 32, %s43, [#allocation5]
    $region21: #{effnetv2_forward.1} parent=1 // pred_fallthru
      _
    // Predicated region
    $region22: #{effnetv2_forward.1} parent=1 // pred_check
      _
    $region23: #{effnetv2_forward.1} parent=1 // pred_check_branch
      %47 = sbr.rel (0) target = $region25
    $region24: #{effnetv2_forward.1} parent=1 // pred_region
      _
    $region25: #{effnetv2_forward.1} parent=1 // pred_fallthru
      _
    // Predicated region
    $region26: #{effnetv2_forward.1} parent=1 // pred_check
      _
    $region27: #{effnetv2_forward.1} parent=1 // pred_check_branch
      %49 = sbr.rel (0) target = $region29
    $region28: #{effnetv2_forward.1} parent=1 // pred_region
      %51 = vsyncadd [#allocation5], 0
      %s53 = sshll.u32 %s6, 4
      %s54 = int_to_ptr.hbm [resolvable:$true] %s53
      %s55 = sshll.u32 [#allocation6], 4
      %s56 = int_to_ptr.vmem [resolvable:$true] %s55
      %58 = dma.hbm_to_vmem [thread:$0]  %s54, 16, %s56, [#allocation5]
    $region29: #{effnetv2_forward.1} parent=1 // pred_fallthru
      _
    // Predicated region
    $region30: #{effnetv2_forward.1} parent=1 // pred_check
      _
    $region31: #{effnetv2_forward.1} parent=1 // pred_check_branch
      %60 = sbr.rel (0) target = $region33
    $region32: #{effnetv2_forward.1} parent=1 // pred_region
      %62 = dma.done [#allocation3], 20480
    $region33: #{effnetv2_forward.1} parent=1 // pred_fallthru
      _
    // Predicated region
    $region34: #{effnetv2_forward.1} parent=1 // pred_check
      _
    $region35: #{effnetv2_forward.1} parent=1 // pred_check_branch
      %64 = sbr.rel (0) target = $region37
    $region36: #{effnetv2_forward.1} parent=1 // pred_region
      %66 = dma.done [#allocation5], 32
    $region37: #{effnetv2_forward.1} parent=1 // pred_fallthru
      _
    // Predicated region
    $region38: #{effnetv2_forward.1} parent=1 // pred_check
      _
    $region39: #{effnetv2_forward.1} parent=1 // pred_check_branch
      %68 = sbr.rel (0) target = $region41
    $region40: #{effnetv2_forward.1} parent=1 // pred_region
      %70 = dma.done [#allocation5], 16
    $region41: #{effnetv2_forward.1} parent=1 // pred_fallthru
      _
    %v72 = vld [vmem:[%s0] sm:$0xff]
    %v73 = vld [vmem:[%s0 + $0x8] sm:$0xff]
    %v74 = vpack.c.bf16 %v73, %v72
    %v75 = vld [vmem:[%s1] sm:$0xff]
    %v76 = vld [vmem:[%s1 + $0x8] sm:$0xff]
    %v77 = vld [vmem:[%s1 + $0x10] sm:$0xf]
    %v78 = vld [vmem:[%s2] sm:$0xff]
    %v79 = vld [vmem:[%s2 + $0x8] sm:$0x3]
    %v82 = vperm.slane %v78, 0
    %v83 = vperm.slane %v78, 1
    %v84 = vperm.slane %v78, 2
    %v85 = vperm.slane %v78, 3
    %v86 = vperm.slane %v78, 4
    %v87 = vperm.slane %v78, 5
    %v88 = vperm.slane %v78, 6
    %v89 = vperm.slane %v78, 7
    %v90 = vperm.slane %v79, 0
    %v91 = vperm.slane %v79, 1
    %103 = vst [vmem:[#allocation1] ss:$4 sm:$0xff] %v75
    %s105 = scalar_lea.vmem [#allocation1], 32
    %106 = vst [vmem:[%s105] ss:$4 sm:$0xff] %v76
    %v107 = vld.sshfl [vmem:[#allocation1] sm:$0xff pattern:$0x73625140]
    %v108 = vld.sshfl [vmem:[#allocation1 + $0x8] sm:$0xff pattern:$0x73625140]
    %v109 = vld.sshfl [vmem:[#allocation1 + $0x10] sm:$0xff pattern:$0x73625140]
    %v110 = vld.sshfl [vmem:[#allocation1 + $0x18] sm:$0xff pattern:$0x73625140]
    %v111 = vld.sshfl [vmem:[#allocation1 + $0x20] sm:$0xff pattern:$0x73625140]
    %v112 = vld.sshfl [vmem:[#allocation1 + $0x28] sm:$0xff pattern:$0x73625140]
    %v113 = vld.sshfl [vmem:[#allocation1 + $0x30] sm:$0xff pattern:$0x73625140]
    %v114 = vld.sshfl [vmem:[#allocation1 + $0x38] sm:$0xff pattern:$0x73625140]
    %116 = vst [vmem:[#allocation1] ss:$4 sm:$0xff] %v77
    %v117 = vld.sshfl [vmem:[#allocation1] sm:$0xff pattern:$0x73625140]
    %v118 = vld.sshfl [vmem:[#allocation1 + $0x8] sm:$0xff pattern:$0x73625140]
    %vm119 = vcmask 31744
    %v121 = vsel %vm119, %v74, 0
    %vm123 = vcmask 1041408
    %v124 = vsel %vm123, %v107, 0
    %v126 = vsel %vm123, %v108, 0
    %v128 = vsel %vm123, %v109, 0
    %v130 = vsel %vm123, %v110, 0
    %v132 = vsel %vm123, %v111, 0
    %v134 = vsel %vm123, %v112, 0
    %v136 = vsel %vm123, %v113, 0
    %v138 = vsel %vm123, %v114, 0
    %v140 = vsel %vm123, %v117, 0
    %v142 = vsel %vm123, %v118, 0
    %144 = vmatpush.bf16.msra.mxu0 0
    %145 = vmatpush.bf16.msra.mxu0 0
    %146 = vmatpush.bf16.msra.mxu0 0
    %147 = vmatpush.bf16.msra.mxu0 0
    %148 = vmatpush.bf16.msra.mxu0 0
    %149 = vmatpush.bf16.msra.mxu0 0
    %150 = vmatpush.bf16.msra.mxu0 0
    %151 = vmatpush.bf16.msra.mxu0 %v124
    %152 = vmatmul.bf16.gmra.mxu0 %v121
    %v153 = vpop.f32.mrf.mxu0
    %v154 = vadd.f32 %v82, %v153
    %v155 = vpop.f32.mrf.mxu0
    %v156 = vadd.f32 %v82, %v155
    %157 = vdwg.mxu0
    %158 = vmatpush.bf16.msra.mxu0 0
    %159 = vmatpush.bf16.msra.mxu0 0
    %160 = vmatpush.bf16.msra.mxu0 0
    %161 = vmatpush.bf16.msra.mxu0 0
    %162 = vmatpush.bf16.msra.mxu0 0
    %163 = vmatpush.bf16.msra.mxu0 0
    %164 = vmatpush.bf16.msra.mxu0 0
    %165 = vmatpush.bf16.msra.mxu0 %v126
    %166 = vmatmul.bf16.gmra.mxu0 %v121
    %v167 = vpop.f32.mrf.mxu0
    %v168 = vadd.f32 %v83, %v167
    %v169 = vpop.f32.mrf.mxu0
    %v170 = vadd.f32 %v83, %v169
    %171 = vdwg.mxu0
    %172 = vmatpush.bf16.msra.mxu0 0
    %173 = vmatpush.bf16.msra.mxu0 0
    %174 = vmatpush.bf16.msra.mxu0 0
    %175 = vmatpush.bf16.msra.mxu0 0
    %176 = vmatpush.bf16.msra.mxu0 0
    %177 = vmatpush.bf16.msra.mxu0 0
    %178 = vmatpush.bf16.msra.mxu0 0
    %179 = vmatpush.bf16.msra.mxu0 %v128
    %180 = vmatmul.bf16.gmra.mxu0 %v121
    %v181 = vpop.f32.mrf.mxu0
    %v182 = vadd.f32 %v84, %v181
    %v183 = vpop.f32.mrf.mxu0
    %v184 = vadd.f32 %v84, %v183
    %185 = vdwg.mxu0
    %186 = vmatpush.bf16.msra.mxu0 0
    %187 = vmatpush.bf16.msra.mxu0 0
    %188 = vmatpush.bf16.msra.mxu0 0
    %189 = vmatpush.bf16.msra.mxu0 0
    %190 = vmatpush.bf16.msra.mxu0 0
    %191 = vmatpush.bf16.msra.mxu0 0
    %192 = vmatpush.bf16.msra.mxu0 0
    %193 = vmatpush.bf16.msra.mxu0 %v130
    %194 = vmatmul.bf16.gmra.mxu0 %v121
    %v195 = vpop.f32.mrf.mxu0
    %v196 = vadd.f32 %v85, %v195
    %v197 = vpop.f32.mrf.mxu0
    %v198 = vadd.f32 %v85, %v197
    %199 = vdwg.mxu0
    %200 = vmatpush.bf16.msra.mxu0 0
    %201 = vmatpush.bf16.msra.mxu0 0
    %202 = vmatpush.bf16.msra.mxu0 0
    %203 = vmatpush.bf16.msra.mxu0 0
    %204 = vmatpush.bf16.msra.mxu0 0
    %205 = vmatpush.bf16.msra.mxu0 0
    %206 = vmatpush.bf16.msra.mxu0 0
    %207 = vmatpush.bf16.msra.mxu0 %v132
    %208 = vmatmul.bf16.gmra.mxu0 %v121
    %v209 = vpop.f32.mrf.mxu0
    %v210 = vadd.f32 %v86, %v209
    %v211 = vpop.f32.mrf.mxu0
    %v212 = vadd.f32 %v86, %v211
    %213 = vdwg.mxu0
    %214 = vmatpush.bf16.msra.mxu0 0
    %215 = vmatpush.bf16.msra.mxu0 0
    %216 = vmatpush.bf16.msra.mxu0 0
    %217 = vmatpush.bf16.msra.mxu0 0
    %218 = vmatpush.bf16.msra.mxu0 0
    %219 = vmatpush.bf16.msra.mxu0 0
    %220 = vmatpush.bf16.msra.mxu0 0
    %221 = vmatpush.bf16.msra.mxu0 %v134
    %222 = vmatmul.bf16.gmra.mxu0 %v121
    %v223 = vpop.f32.mrf.mxu0
    %v224 = vadd.f32 %v87, %v223
    %v225 = vpop.f32.mrf.mxu0
    %v226 = vadd.f32 %v87, %v225
    %227 = vdwg.mxu0
    %228 = vmatpush.bf16.msra.mxu0 0
    %229 = vmatpush.bf16.msra.mxu0 0
    %230 = vmatpush.bf16.msra.mxu0 0
    %231 = vmatpush.bf16.msra.mxu0 0
    %232 = vmatpush.bf16.msra.mxu0 0
    %233 = vmatpush.bf16.msra.mxu0 0
    %234 = vmatpush.bf16.msra.mxu0 0
    %235 = vmatpush.bf16.msra.mxu0 %v136
    %236 = vmatmul.bf16.gmra.mxu0 %v121
    %v237 = vpop.f32.mrf.mxu0
    %v238 = vadd.f32 %v88, %v237
    %v239 = vpop.f32.mrf.mxu0
    %v240 = vadd.f32 %v88, %v239
    %241 = vdwg.mxu0
    %242 = vmatpush.bf16.msra.mxu0 0
    %243 = vmatpush.bf16.msra.mxu0 0
    %244 = vmatpush.bf16.msra.mxu0 0
    %245 = vmatpush.bf16.msra.mxu0 0
    %246 = vmatpush.bf16.msra.mxu0 0
    %247 = vmatpush.bf16.msra.mxu0 0
    %248 = vmatpush.bf16.msra.mxu0 0
    %249 = vmatpush.bf16.msra.mxu0 %v138
    %250 = vmatmul.bf16.gmra.mxu0 %v121
    %v251 = vpop.f32.mrf.mxu0
    %v252 = vadd.f32 %v89, %v251
    %v253 = vpop.f32.mrf.mxu0
    %v254 = vadd.f32 %v89, %v253
    %255 = vdwg.mxu0
    %256 = vmatpush.bf16.msra.mxu0 0
    %257 = vmatpush.bf16.msra.mxu0 0
    %258 = vmatpush.bf16.msra.mxu0 0
    %259 = vmatpush.bf16.msra.mxu0 0
    %260 = vmatpush.bf16.msra.mxu0 0
    %261 = vmatpush.bf16.msra.mxu0 0
    %262 = vmatpush.bf16.msra.mxu0 0
    %263 = vmatpush.bf16.msra.mxu0 %v140
    %264 = vmatmul.bf16.gmra.mxu0 %v121
    %v265 = vpop.f32.mrf.mxu0
    %v266 = vadd.f32 %v90, %v265
    %v267 = vpop.f32.mrf.mxu0
    %v268 = vadd.f32 %v90, %v267
    %269 = vdwg.mxu0
    %270 = vmatpush.bf16.msra.mxu0 0
    %271 = vmatpush.bf16.msra.mxu0 0
    %272 = vmatpush.bf16.msra.mxu0 0
    %273 = vmatpush.bf16.msra.mxu0 0
    %274 = vmatpush.bf16.msra.mxu0 0
    %275 = vmatpush.bf16.msra.mxu0 0
    %276 = vmatpush.bf16.msra.mxu0 0
    %277 = vmatpush.bf16.msra.mxu0 %v142
    %278 = vmatmul.bf16.gmra.mxu0 %v121
    %v279 = vpop.f32.mrf.mxu0
    %v280 = vadd.f32 %v91, %v279
    %v281 = vpop.f32.mrf.mxu0
    %v282 = vadd.f32 %v91, %v281
    %283 = vdwg.mxu0
    %v284 = vpack.c.bf16 %v156, %v154
    %v285 = vpack.c.bf16 %v170, %v168
    %v286 = vpack.c.bf16 %v184, %v182
    %v287 = vpack.c.bf16 %v198, %v196
    %v288 = vpack.c.bf16 %v212, %v210
    %v289 = vpack.c.bf16 %v226, %v224
    %v290 = vpack.c.bf16 %v240, %v238
    %v291 = vpack.c.bf16 %v254, %v252
    %v292 = vpack.c.bf16 %v268, %v266
    %v293 = vpack.c.bf16 %v282, %v280
    %v294 = vld [vmem:[#allocation2] sm:$0xff]
    %v295 = vld [vmem:[#allocation2 + $0x8] sm:$0xff]
    %v296 = vld [vmem:[#allocation2 + $0x10] sm:$0xff]
    %v297 = vld [vmem:[#allocation2 + $0x18] sm:$0xff]
    %v298 = vld [vmem:[#allocation2 + $0x20] sm:$0xff]
    %v299 = vld [vmem:[#allocation2 + $0x28] sm:$0xff]
    %v300 = vld [vmem:[#allocation2 + $0x30] sm:$0xff]
    %v301 = vld [vmem:[#allocation2 + $0x38] sm:$0xff]
    %v302 = vld [vmem:[#allocation2 + $0x40] sm:$0xff]
    %v303 = vld [vmem:[#allocation2 + $0x48] sm:$0xff]
    %v304 = vld [vmem:[#allocation2 + $0x50] sm:$0xff]
    %v305 = vld [vmem:[#allocation2 + $0x58] sm:$0xff]
    %v306 = vld [vmem:[#allocation2 + $0x60] sm:$0xff]
    %v307 = vld [vmem:[#allocation2 + $0x68] sm:$0xff]
    %v308 = vld [vmem:[#allocation2 + $0x70] sm:$0xff]
    %v309 = vld [vmem:[#allocation2 + $0x78] sm:$0xff]
    %v310 = vld [vmem:[#allocation2 + $0x80] sm:$0xff]
    %v311 = vld [vmem:[#allocation2 + $0x88] sm:$0xff]
    %v312 = vld [vmem:[#allocation2 + $0x90] sm:$0xff]
    %v313 = vld [vmem:[#allocation2 + $0x98] sm:$0xff]
    %v314 = vld [vmem:[#allocation2 + $0xa0] sm:$0xff]
    %v315 = vld [vmem:[#allocation2 + $0xa8] sm:$0xff]
    %v316 = vld [vmem:[#allocation2 + $0xb0] sm:$0xff]
    %v317 = vld [vmem:[#allocation2 + $0xb8] sm:$0xff]
    %v318 = vld [vmem:[#allocation2 + $0xc0] sm:$0xff]
    %v319 = vld [vmem:[#allocation2 + $0xc8] sm:$0xff]
    %v320 = vld [vmem:[#allocation2 + $0xd0] sm:$0xff]
    %v321 = vld [vmem:[#allocation2 + $0xd8] sm:$0xff]
    %v322 = vld [vmem:[#allocation2 + $0xe0] sm:$0xff]
    %v323 = vld [vmem:[#allocation2 + $0xe8] sm:$0xff]
    %v324 = vld [vmem:[#allocation2 + $0xf0] sm:$0xff]
    %v325 = vld [vmem:[#allocation2 + $0xf8] sm:$0xff]
    %v326 = vld [vmem:[#allocation2 + $0x100] sm:$0xff]
    %v327 = vld [vmem:[#allocation2 + $0x108] sm:$0xff]
    %v328 = vld [vmem:[#allocation2 + $0x110] sm:$0xff]
    %v329 = vld [vmem:[#allocation2 + $0x118] sm:$0xff]
    %v330 = vld [vmem:[#allocation2 + $0x120] sm:$0xff]
    %v331 = vld [vmem:[#allocation2 + $0x128] sm:$0xff]
    %v332 = vld [vmem:[#allocation2 + $0x130] sm:$0xff]
    %v333 = vld [vmem:[#allocation2 + $0x138] sm:$0xff]
    %v334 = vld [vmem:[#allocation2 + $0x140] sm:$0xff]
    %v335 = vld [vmem:[#allocation2 + $0x148] sm:$0xff]
    %v336 = vld [vmem:[#allocation2 + $0x150] sm:$0xff]
    %v337 = vld [vmem:[#allocation2 + $0x158] sm:$0xff]
    %v338 = vld [vmem:[#allocation2 + $0x160] sm:$0xff]
    %v339 = vld [vmem:[#allocation2 + $0x168] sm:$0xff]
    %v340 = vld [vmem:[#allocation2 + $0x170] sm:$0xff]
    %v341 = vld [vmem:[#allocation2 + $0x178] sm:$0xff]
    %v342 = vld [vmem:[#allocation2 + $0x180] sm:$0xff]
    %v343 = vld [vmem:[#allocation2 + $0x188] sm:$0xff]
    %v344 = vld [vmem:[#allocation2 + $0x190] sm:$0xff]
    %v345 = vld [vmem:[#allocation2 + $0x198] sm:$0xff]
    %v346 = vld [vmem:[#allocation2 + $0x1a0] sm:$0xff]
    %v347 = vld [vmem:[#allocation2 + $0x1a8] sm:$0xff]
    %v348 = vld [vmem:[#allocation2 + $0x1b0] sm:$0xff]
    %v349 = vld [vmem:[#allocation2 + $0x1b8] sm:$0xff]
    %v350 = vld [vmem:[#allocation2 + $0x1c0] sm:$0xff]
    %v351 = vld [vmem:[#allocation2 + $0x1c8] sm:$0xff]
    %v352 = vld [vmem:[#allocation2 + $0x1d0] sm:$0xff]
    %v353 = vld [vmem:[#allocation2 + $0x1d8] sm:$0xff]
    %v354 = vld [vmem:[#allocation2 + $0x1e0] sm:$0xff]
    %v355 = vld [vmem:[#allocation2 + $0x1e8] sm:$0xff]
    %v356 = vld [vmem:[#allocation2 + $0x1f0] sm:$0xff]
    %v357 = vld [vmem:[#allocation2 + $0x1f8] sm:$0xff]
    %v358 = vld [vmem:[#allocation2 + $0x200] sm:$0xff]
    %v359 = vld [vmem:[#allocation2 + $0x208] sm:$0xff]
    %v360 = vld [vmem:[#allocation2 + $0x210] sm:$0xff]
    %v361 = vld [vmem:[#allocation2 + $0x218] sm:$0xff]
    %v362 = vld [vmem:[#allocation2 + $0x220] sm:$0xff]
    %v363 = vld [vmem:[#allocation2 + $0x228] sm:$0xff]
    %v364 = vld [vmem:[#allocation2 + $0x230] sm:$0xff]
    %v365 = vld [vmem:[#allocation2 + $0x238] sm:$0xff]
    %v366 = vld [vmem:[#allocation2 + $0x240] sm:$0xff]
    %v367 = vld [vmem:[#allocation2 + $0x248] sm:$0xff]
    %v368 = vld [vmem:[#allocation2 + $0x250] sm:$0xff]
    %v369 = vld [vmem:[#allocation2 + $0x258] sm:$0xff]
    %v370 = vld [vmem:[#allocation2 + $0x260] sm:$0xff]
    %v371 = vld [vmem:[#allocation2 + $0x268] sm:$0xff]
    %v372 = vld [vmem:[#allocation2 + $0x270] sm:$0xff]
    %v373 = vld [vmem:[#allocation2 + $0x278] sm:$0xff]
    %v374 = vld [vmem:[#allocation2 + $0x280] sm:$0xff]
    %v375 = vld [vmem:[#allocation2 + $0x288] sm:$0xff]
    %v376 = vld [vmem:[#allocation2 + $0x290] sm:$0xff]
    %v377 = vld [vmem:[#allocation2 + $0x298] sm:$0xff]
    %v378 = vld [vmem:[#allocation2 + $0x2a0] sm:$0xff]
    %v379 = vld [vmem:[#allocation2 + $0x2a8] sm:$0xff]
    %v380 = vld [vmem:[#allocation2 + $0x2b0] sm:$0xff]
    %v381 = vld [vmem:[#allocation2 + $0x2b8] sm:$0xff]
    %v382 = vld [vmem:[#allocation2 + $0x2c0] sm:$0xff]
    %v383 = vld [vmem:[#allocation2 + $0x2c8] sm:$0xff]
    %v384 = vld [vmem:[#allocation2 + $0x2d0] sm:$0xff]
    %v385 = vld [vmem:[#allocation2 + $0x2d8] sm:$0xff]
    %v386 = vld [vmem:[#allocation2 + $0x2e0] sm:$0xff]
    %v387 = vld [vmem:[#allocation2 + $0x2e8] sm:$0xff]
    %v388 = vld [vmem:[#allocation2 + $0x2f0] sm:$0xff]
    %v389 = vld [vmem:[#allocation2 + $0x2f8] sm:$0xff]
    %v390 = vld [vmem:[#allocation2 + $0x300] sm:$0xff]
    %v391 = vld [vmem:[#allocation2 + $0x308] sm:$0xff]
    %v392 = vld [vmem:[#allocation2 + $0x310] sm:$0xff]
    %v393 = vld [vmem:[#allocation2 + $0x318] sm:$0xff]
    %v394 = vld [vmem:[#allocation2 + $0x320] sm:$0xff]
    %v395 = vld [vmem:[#allocation2 + $0x328] sm:$0xff]
    %v396 = vld [vmem:[#allocation2 + $0x330] sm:$0xff]
    %v397 = vld [vmem:[#allocation2 + $0x338] sm:$0xff]
    %v398 = vld [vmem:[#allocation2 + $0x340] sm:$0xff]
    %v399 = vld [vmem:[#allocation2 + $0x348] sm:$0xff]
    %v400 = vld [vmem:[#allocation2 + $0x350] sm:$0xff]
    %v401 = vld [vmem:[#allocation2 + $0x358] sm:$0xff]
    %v402 = vld [vmem:[#allocation2 + $0x360] sm:$0xff]
    %v403 = vld [vmem:[#allocation2 + $0x368] sm:$0xff]
    %v404 = vld [vmem:[#allocation2 + $0x370] sm:$0xff]
    %v405 = vld [vmem:[#allocation2 + $0x378] sm:$0xff]
    %v406 = vld [vmem:[#allocation2 + $0x380] sm:$0xff]
    %v407 = vld [vmem:[#allocation2 + $0x388] sm:$0xff]
    %v408 = vld [vmem:[#allocation2 + $0x390] sm:$0xff]
    %v409 = vld [vmem:[#allocation2 + $0x398] sm:$0xff]
    %v410 = vld [vmem:[#allocation2 + $0x3a0] sm:$0xff]
    %v411 = vld [vmem:[#allocation2 + $0x3a8] sm:$0xff]
    %v412 = vld [vmem:[#allocation2 + $0x3b0] sm:$0xff]
    %v413 = vld [vmem:[#allocation2 + $0x3b8] sm:$0xff]
    %v414 = vld [vmem:[#allocation2 + $0x3c0] sm:$0xff]
    %v415 = vld [vmem:[#allocation2 + $0x3c8] sm:$0xff]
    %v416 = vld [vmem:[#allocation2 + $0x3d0] sm:$0xff]
    %v417 = vld [vmem:[#allocation2 + $0x3d8] sm:$0xff]
    %v418 = vld [vmem:[#allocation2 + $0x3e0] sm:$0xff]
    %v419 = vld [vmem:[#allocation2 + $0x3e8] sm:$0xff]
    %v420 = vld [vmem:[#allocation2 + $0x3f0] sm:$0xff]
    %v421 = vld [vmem:[#allocation2 + $0x3f8] sm:$0xff]
    %v422 = vld [vmem:[#allocation2 + $0x400] sm:$0xff]
    %v423 = vld [vmem:[#allocation2 + $0x408] sm:$0xff]
    %v424 = vld [vmem:[#allocation2 + $0x410] sm:$0xff]
    %v425 = vld [vmem:[#allocation2 + $0x418] sm:$0xff]
    %v426 = vld [vmem:[#allocation2 + $0x420] sm:$0xff]
    %v427 = vld [vmem:[#allocation2 + $0x428] sm:$0xff]
    %v428 = vld [vmem:[#allocation2 + $0x430] sm:$0xff]
    %v429 = vld [vmem:[#allocation2 + $0x438] sm:$0xff]
    %v430 = vld [vmem:[#allocation2 + $0x440] sm:$0xff]
    %v431 = vld [vmem:[#allocation2 + $0x448] sm:$0xff]
    %v432 = vld [vmem:[#allocation2 + $0x450] sm:$0xff]
    %v433 = vld [vmem:[#allocation2 + $0x458] sm:$0xff]
    %v434 = vld [vmem:[#allocation2 + $0x460] sm:$0xff]
    %v435 = vld [vmem:[#allocation2 + $0x468] sm:$0xff]
    %v436 = vld [vmem:[#allocation2 + $0x470] sm:$0xff]
    %v437 = vld [vmem:[#allocation2 + $0x478] sm:$0xff]
    %v438 = vld [vmem:[#allocation2 + $0x480] sm:$0xff]
    %v439 = vld [vmem:[#allocation2 + $0x488] sm:$0xff]
    %v440 = vld [vmem:[#allocation2 + $0x490] sm:$0xff]
    %v441 = vld [vmem:[#allocation2 + $0x498] sm:$0xff]
    %v442 = vld [vmem:[#allocation2 + $0x4a0] sm:$0xff]
    %v443 = vld [vmem:[#allocation2 + $0x4a8] sm:$0xff]
    %v444 = vld [vmem:[#allocation2 + $0x4b0] sm:$0xff]
    %v445 = vld [vmem:[#allocation2 + $0x4b8] sm:$0xff]
    %v446 = vld [vmem:[#allocation2 + $0x4c0] sm:$0xff]
    %v447 = vld [vmem:[#allocation2 + $0x4c8] sm:$0xff]
    %v448 = vld [vmem:[#allocation2 + $0x4d0] sm:$0xff]
    %v449 = vld [vmem:[#allocation2 + $0x4d8] sm:$0xff]
    %v450 = vld [vmem:[#allocation2 + $0x4e0] sm:$0xff]
    %v451 = vld [vmem:[#allocation2 + $0x4e8] sm:$0xff]
    %v452 = vld [vmem:[#allocation2 + $0x4f0] sm:$0xff]
    %v453 = vld [vmem:[#allocation2 + $0x4f8] sm:$0xff]
    %v454 = vld [vmem:[#allocation4] sm:$0x3]
    %v456 = vperm.slane %v454, 0
    %v457 = vperm.slane %v454, 1
    %v620 = vunpack.c.l.b16 %v294
    %v621 = vunpack.c.h.b16 %v294
    %v622 = vunpack.c.l.b16 %v295
    %v623 = vunpack.c.h.b16 %v295
    %v624 = vunpack.c.l.b16 %v296
    %v625 = vunpack.c.h.b16 %v296
    %v626 = vunpack.c.l.b16 %v297
    %v627 = vunpack.c.h.b16 %v297
    %v628 = vunpack.c.l.b16 %v298
    %v629 = vunpack.c.h.b16 %v298
    %v630 = vunpack.c.l.b16 %v299
    %v631 = vunpack.c.h.b16 %v299
    %v632 = vunpack.c.l.b16 %v300
    %v633 = vunpack.c.h.b16 %v300
    %v634 = vunpack.c.l.b16 %v301
    %v635 = vunpack.c.h.b16 %v301
    %v636 = vunpack.c.l.b16 %v302
    %v637 = vunpack.c.h.b16 %v302
    %v638 = vunpack.c.l.b16 %v303
    %v639 = vunpack.c.h.b16 %v303
    %v640 = vunpack.c.l.b16 %v304
    %v641 = vunpack.c.h.b16 %v304
    %v642 = vunpack.c.l.b16 %v305
    %v643 = vunpack.c.h.b16 %v305
    %v644 = vunpack.c.l.b16 %v306
    %v645 = vunpack.c.h.b16 %v306
    %v646 = vunpack.c.l.b16 %v307
    %v647 = vunpack.c.h.b16 %v307
    %v648 = vunpack.c.l.b16 %v308
    %v649 = vunpack.c.h.b16 %v308
    %v650 = vunpack.c.l.b16 %v309
    %v651 = vunpack.c.h.b16 %v309
    %v652 = vunpack.c.l.b16 %v310
    %v653 = vunpack.c.h.b16 %v310
    %v654 = vunpack.c.l.b16 %v311
    %v655 = vunpack.c.h.b16 %v311
    %v656 = vunpack.c.l.b16 %v312
    %v657 = vunpack.c.h.b16 %v312
    %v658 = vunpack.c.l.b16 %v313
    %v659 = vunpack.c.h.b16 %v313
    %v660 = vunpack.c.l.b16 %v314
    %v661 = vunpack.c.h.b16 %v314
    %v662 = vunpack.c.l.b16 %v315
    %v663 = vunpack.c.h.b16 %v315
    %v664 = vunpack.c.l.b16 %v316
    %v665 = vunpack.c.h.b16 %v316
    %v666 = vunpack.c.l.b16 %v317
    %v667 = vunpack.c.h.b16 %v317
    %v668 = vunpack.c.l.b16 %v318
    %v669 = vunpack.c.h.b16 %v318
    %v670 = vunpack.c.l.b16 %v319
    %v671 = vunpack.c.h.b16 %v319
    %v672 = vunpack.c.l.b16 %v320
    %v673 = vunpack.c.h.b16 %v320
    %v674 = vunpack.c.l.b16 %v321
    %v675 = vunpack.c.h.b16 %v321
    %v676 = vunpack.c.l.b16 %v322
    %v677 = vunpack.c.h.b16 %v322
    %v678 = vunpack.c.l.b16 %v323
    %v679 = vunpack.c.h.b16 %v323
    %v680 = vunpack.c.l.b16 %v324
    %v681 = vunpack.c.h.b16 %v324
    %v682 = vunpack.c.l.b16 %v325
    %v683 = vunpack.c.h.b16 %v325
    %v684 = vunpack.c.l.b16 %v326
    %v685 = vunpack.c.h.b16 %v326
    %v686 = vunpack.c.l.b16 %v327
    %v687 = vunpack.c.h.b16 %v327
    %v688 = vunpack.c.l.b16 %v328
    %v689 = vunpack.c.h.b16 %v328
    %v690 = vunpack.c.l.b16 %v329
    %v691 = vunpack.c.h.b16 %v329
    %v692 = vunpack.c.l.b16 %v330
    %v693 = vunpack.c.h.b16 %v330
    %v694 = vunpack.c.l.b16 %v331
    %v695 = vunpack.c.h.b16 %v331
    %v696 = vunpack.c.l.b16 %v332
    %v697 = vunpack.c.h.b16 %v332
    %v698 = vunpack.c.l.b16 %v333
    %v699 = vunpack.c.h.b16 %v333
    %v700 = vunpack.c.l.b16 %v334
    %v701 = vunpack.c.h.b16 %v334
    %v702 = vunpack.c.l.b16 %v335
    %v703 = vunpack.c.h.b16 %v335
    %v704 = vunpack.c.l.b16 %v336
    %v705 = vunpack.c.h.b16 %v336
    %v706 = vunpack.c.l.b16 %v337
    %v707 = vunpack.c.h.b16 %v337
    %v708 = vunpack.c.l.b16 %v338
    %v709 = vunpack.c.h.b16 %v338
    %v710 = vunpack.c.l.b16 %v339
    %v711 = vunpack.c.h.b16 %v339
    %v712 = vunpack.c.l.b16 %v340
    %v713 = vunpack.c.h.b16 %v340
    %v714 = vunpack.c.l.b16 %v341
    %v715 = vunpack.c.h.b16 %v341
    %v716 = vunpack.c.l.b16 %v342
    %v717 = vunpack.c.h.b16 %v342
    %v718 = vunpack.c.l.b16 %v343
    %v719 = vunpack.c.h.b16 %v343
    %v720 = vunpack.c.l.b16 %v344
    %v721 = vunpack.c.h.b16 %v344
    %v722 = vunpack.c.l.b16 %v345
    %v723 = vunpack.c.h.b16 %v345
    %v724 = vunpack.c.l.b16 %v346
    %v725 = vunpack.c.h.b16 %v346
    %v726 = vunpack.c.l.b16 %v347
    %v727 = vunpack.c.h.b16 %v347
    %v728 = vunpack.c.l.b16 %v348
    %v729 = vunpack.c.h.b16 %v348
    %v730 = vunpack.c.l.b16 %v349
    %v731 = vunpack.c.h.b16 %v349
    %v732 = vunpack.c.l.b16 %v350
    %v733 = vunpack.c.h.b16 %v350
    %v734 = vunpack.c.l.b16 %v351
    %v735 = vunpack.c.h.b16 %v351
    %v736 = vunpack.c.l.b16 %v352
    %v737 = vunpack.c.h.b16 %v352
    %v738 = vunpack.c.l.b16 %v353
    %v739 = vunpack.c.h.b16 %v353
    %v740 = vunpack.c.l.b16 %v354
    %v741 = vunpack.c.h.b16 %v354
    %v742 = vunpack.c.l.b16 %v355
    %v743 = vunpack.c.h.b16 %v355
    %v744 = vunpack.c.l.b16 %v356
    %v745 = vunpack.c.h.b16 %v356
    %v746 = vunpack.c.l.b16 %v357
    %v747 = vunpack.c.h.b16 %v357
    %v748 = vunpack.c.l.b16 %v358
    %v749 = vunpack.c.h.b16 %v358
    %v750 = vunpack.c.l.b16 %v359
    %v751 = vunpack.c.h.b16 %v359
    %v752 = vunpack.c.l.b16 %v360
    %v753 = vunpack.c.h.b16 %v360
    %v754 = vunpack.c.l.b16 %v361
    %v755 = vunpack.c.h.b16 %v361
    %v756 = vunpack.c.l.b16 %v362
    %v757 = vunpack.c.h.b16 %v362
    %v758 = vunpack.c.l.b16 %v363
    %v759 = vunpack.c.h.b16 %v363
    %v760 = vunpack.c.l.b16 %v364
    %v761 = vunpack.c.h.b16 %v364
    %v762 = vunpack.c.l.b16 %v365
    %v763 = vunpack.c.h.b16 %v365
    %v764 = vunpack.c.l.b16 %v366
    %v765 = vunpack.c.h.b16 %v366
    %v766 = vunpack.c.l.b16 %v367
    %v767 = vunpack.c.h.b16 %v367
    %v768 = vunpack.c.l.b16 %v368
    %v769 = vunpack.c.h.b16 %v368
    %v770 = vunpack.c.l.b16 %v369
    %v771 = vunpack.c.h.b16 %v369
    %v772 = vunpack.c.l.b16 %v370
    %v773 = vunpack.c.h.b16 %v370
    %v774 = vunpack.c.l.b16 %v371
    %v775 = vunpack.c.h.b16 %v371
    %v776 = vunpack.c.l.b16 %v372
    %v777 = vunpack.c.h.b16 %v372
    %v778 = vunpack.c.l.b16 %v373
    %v779 = vunpack.c.h.b16 %v373
    %v780 = vunpack.c.l.b16 %v374
    %v781 = vunpack.c.h.b16 %v374
    %v782 = vunpack.c.l.b16 %v375
    %v783 = vunpack.c.h.b16 %v375
    %v784 = vunpack.c.l.b16 %v376
    %v785 = vunpack.c.h.b16 %v376
    %v786 = vunpack.c.l.b16 %v377
    %v787 = vunpack.c.h.b16 %v377
    %v788 = vunpack.c.l.b16 %v378
    %v789 = vunpack.c.h.b16 %v378
    %v790 = vunpack.c.l.b16 %v379
    %v791 = vunpack.c.h.b16 %v379
    %v792 = vunpack.c.l.b16 %v380
    %v793 = vunpack.c.h.b16 %v380
    %v794 = vunpack.c.l.b16 %v381
    %v795 = vunpack.c.h.b16 %v381
    %v796 = vunpack.c.l.b16 %v382
    %v797 = vunpack.c.h.b16 %v382
    %v798 = vunpack.c.l.b16 %v383
    %v799 = vunpack.c.h.b16 %v383
    %v800 = vunpack.c.l.b16 %v384
    %v801 = vunpack.c.h.b16 %v384
    %v802 = vunpack.c.l.b16 %v385
    %v803 = vunpack.c.h.b16 %v385
    %v804 = vunpack.c.l.b16 %v386
    %v805 = vunpack.c.h.b16 %v386
    %v806 = vunpack.c.l.b16 %v387
    %v807 = vunpack.c.h.b16 %v387
    %v808 = vunpack.c.l.b16 %v388
    %v809 = vunpack.c.h.b16 %v388
    %v810 = vunpack.c.l.b16 %v389
    %v811 = vunpack.c.h.b16 %v389
    %v812 = vunpack.c.l.b16 %v390
    %v813 = vunpack.c.h.b16 %v390
    %v814 = vunpack.c.l.b16 %v391
    %v815 = vunpack.c.h.b16 %v391
    %v816 = vunpack.c.l.b16 %v392
    %v817 = vunpack.c.h.b16 %v392
    %v818 = vunpack.c.l.b16 %v393
    %v819 = vunpack.c.h.b16 %v393
    %v820 = vunpack.c.l.b16 %v394
    %v821 = vunpack.c.h.b16 %v394
    %v822 = vunpack.c.l.b16 %v395
    %v823 = vunpack.c.h.b16 %v395
    %v824 = vunpack.c.l.b16 %v396
    %v825 = vunpack.c.h.b16 %v396
    %v826 = vunpack.c.l.b16 %v397
    %v827 = vunpack.c.h.b16 %v397
    %v828 = vunpack.c.l.b16 %v398
    %v829 = vunpack.c.h.b16 %v398
    %v830 = vunpack.c.l.b16 %v399
    %v831 = vunpack.c.h.b16 %v399
    %v832 = vunpack.c.l.b16 %v400
    %v833 = vunpack.c.h.b16 %v400
    %v834 = vunpack.c.l.b16 %v401
    %v835 = vunpack.c.h.b16 %v401
    %v836 = vunpack.c.l.b16 %v402
    %v837 = vunpack.c.h.b16 %v402
    %v838 = vunpack.c.l.b16 %v403
    %v839 = vunpack.c.h.b16 %v403
    %v840 = vunpack.c.l.b16 %v404
    %v841 = vunpack.c.h.b16 %v404
    %v842 = vunpack.c.l.b16 %v405
    %v843 = vunpack.c.h.b16 %v405
    %v844 = vunpack.c.l.b16 %v406
    %v845 = vunpack.c.h.b16 %v406
    %v846 = vunpack.c.l.b16 %v407
    %v847 = vunpack.c.h.b16 %v407
    %v848 = vunpack.c.l.b16 %v408
    %v849 = vunpack.c.h.b16 %v408
    %v850 = vunpack.c.l.b16 %v409
    %v851 = vunpack.c.h.b16 %v409
    %v852 = vunpack.c.l.b16 %v410
    %v853 = vunpack.c.h.b16 %v410
    %v854 = vunpack.c.l.b16 %v411
    %v855 = vunpack.c.h.b16 %v411
    %v856 = vunpack.c.l.b16 %v412
    %v857 = vunpack.c.h.b16 %v412
    %v858 = vunpack.c.l.b16 %v413
    %v859 = vunpack.c.h.b16 %v413
    %v860 = vunpack.c.l.b16 %v414
    %v861 = vunpack.c.h.b16 %v414
    %v862 = vunpack.c.l.b16 %v415
    %v863 = vunpack.c.h.b16 %v415
    %v864 = vunpack.c.l.b16 %v416
    %v865 = vunpack.c.h.b16 %v416
    %v866 = vunpack.c.l.b16 %v417
    %v867 = vunpack.c.h.b16 %v417
    %v868 = vunpack.c.l.b16 %v418
    %v869 = vunpack.c.h.b16 %v418
    %v870 = vunpack.c.l.b16 %v419
    %v871 = vunpack.c.h.b16 %v419
    %v872 = vunpack.c.l.b16 %v420
    %v873 = vunpack.c.h.b16 %v420
    %v874 = vunpack.c.l.b16 %v421
    %v875 = vunpack.c.h.b16 %v421
    %v876 = vunpack.c.l.b16 %v422
    %v877 = vunpack.c.h.b16 %v422
    %v878 = vunpack.c.l.b16 %v423
    %v879 = vunpack.c.h.b16 %v423
    %v880 = vunpack.c.l.b16 %v424
    %v881 = vunpack.c.h.b16 %v424
    %v882 = vunpack.c.l.b16 %v425
    %v883 = vunpack.c.h.b16 %v425
    %v884 = vunpack.c.l.b16 %v426
    %v885 = vunpack.c.h.b16 %v426
    %v886 = vunpack.c.l.b16 %v427
    %v887 = vunpack.c.h.b16 %v427
    %v888 = vunpack.c.l.b16 %v428
    %v889 = vunpack.c.h.b16 %v428
    %v890 = vunpack.c.l.b16 %v429
    %v891 = vunpack.c.h.b16 %v429
    %v892 = vunpack.c.l.b16 %v430
    %v893 = vunpack.c.h.b16 %v430
    %v894 = vunpack.c.l.b16 %v431
    %v895 = vunpack.c.h.b16 %v431
    %v896 = vunpack.c.l.b16 %v432
    %v897 = vunpack.c.h.b16 %v432
    %v898 = vunpack.c.l.b16 %v433
    %v899 = vunpack.c.h.b16 %v433
    %v900 = vunpack.c.l.b16 %v434
    %v901 = vunpack.c.h.b16 %v434
    %v902 = vunpack.c.l.b16 %v435
    %v903 = vunpack.c.h.b16 %v435
    %v904 = vunpack.c.l.b16 %v436
    %v905 = vunpack.c.h.b16 %v436
    %v906 = vunpack.c.l.b16 %v437
    %v907 = vunpack.c.h.b16 %v437
    %v908 = vunpack.c.l.b16 %v438
    %v909 = vunpack.c.h.b16 %v438
    %v910 = vunpack.c.l.b16 %v439
    %v911 = vunpack.c.h.b16 %v439
    %v912 = vunpack.c.l.b16 %v440
    %v913 = vunpack.c.h.b16 %v440
    %v914 = vunpack.c.l.b16 %v441
    %v915 = vunpack.c.h.b16 %v441
    %v916 = vunpack.c.l.b16 %v442
    %v917 = vunpack.c.h.b16 %v442
    %v918 = vunpack.c.l.b16 %v443
    %v919 = vunpack.c.h.b16 %v443
    %v920 = vunpack.c.l.b16 %v444
    %v921 = vunpack.c.h.b16 %v444
    %v922 = vunpack.c.l.b16 %v445
    %v923 = vunpack.c.h.b16 %v445
    %v924 = vunpack.c.l.b16 %v446
    %v925 = vunpack.c.h.b16 %v446
    %v926 = vunpack.c.l.b16 %v447
    %v927 = vunpack.c.h.b16 %v447
    %v928 = vunpack.c.l.b16 %v448
    %v929 = vunpack.c.h.b16 %v448
    %v930 = vunpack.c.l.b16 %v449
    %v931 = vunpack.c.h.b16 %v449
    %v932 = vunpack.c.l.b16 %v450
    %v933 = vunpack.c.h.b16 %v450
    %v934 = vunpack.c.l.b16 %v451
    %v935 = vunpack.c.h.b16 %v451
    %v936 = vunpack.c.l.b16 %v452
    %v937 = vunpack.c.h.b16 %v452
    %v938 = vunpack.c.l.b16 %v453
    %v939 = vunpack.c.h.b16 %v453
    %v940 = vpack.c.b16 %v622, %v620
    %v941 = vpack.c.b16 %v623, %v621
    %v942 = vpack.c.b16 %v626, %v624
    %v943 = vpack.c.b16 %v627, %v625
    %v944 = vpack.c.b16 %v630, %v628
    %v945 = vpack.c.b16 %v631, %v629
    %v946 = vpack.c.b16 %v634, %v632
    %v947 = vpack.c.b16 %v635, %v633
    %v948 = vpack.c.b16 %v638, %v636
    %v949 = vpack.c.b16 %v639, %v637
    %v950 = vpack.c.b16 %v642, %v640
    %v951 = vpack.c.b16 %v643, %v641
    %v952 = vpack.c.b16 %v646, %v644
    %v953 = vpack.c.b16 %v647, %v645
    %v954 = vpack.c.b16 %v650, %v648
    %v955 = vpack.c.b16 %v651, %v649
    %v956 = vpack.c.b16 %v654, %v652
    %v957 = vpack.c.b16 %v655, %v653
    %v958 = vpack.c.b16 %v658, %v656
    %v959 = vpack.c.b16 %v659, %v657
    %v960 = vpack.c.b16 %v662, %v660
    %v961 = vpack.c.b16 %v663, %v661
    %v962 = vpack.c.b16 %v666, %v664
    %v963 = vpack.c.b16 %v667, %v665
    %v964 = vpack.c.b16 %v670, %v668
    %v965 = vpack.c.b16 %v671, %v669
    %v966 = vpack.c.b16 %v674, %v672
    %v967 = vpack.c.b16 %v675, %v673
    %v968 = vpack.c.b16 %v678, %v676
    %v969 = vpack.c.b16 %v679, %v677
    %v970 = vpack.c.b16 %v682, %v680
    %v971 = vpack.c.b16 %v683, %v681
    %v972 = vpack.c.b16 %v686, %v684
    %v973 = vpack.c.b16 %v687, %v685
    %v974 = vpack.c.b16 %v690, %v688
    %v975 = vpack.c.b16 %v691, %v689
    %v976 = vpack.c.b16 %v694, %v692
    %v977 = vpack.c.b16 %v695, %v693
    %v978 = vpack.c.b16 %v698, %v696
    %v979 = vpack.c.b16 %v699, %v697
    %v980 = vpack.c.b16 %v702, %v700
    %v981 = vpack.c.b16 %v703, %v701
    %v982 = vpack.c.b16 %v706, %v704
    %v983 = vpack.c.b16 %v707, %v705
    %v984 = vpack.c.b16 %v710, %v708
    %v985 = vpack.c.b16 %v711, %v709
    %v986 = vpack.c.b16 %v714, %v712
    %v987 = vpack.c.b16 %v715, %v713
    %v988 = vpack.c.b16 %v718, %v716
    %v989 = vpack.c.b16 %v719, %v717
    %v990 = vpack.c.b16 %v722, %v720
    %v991 = vpack.c.b16 %v723, %v721
    %v992 = vpack.c.b16 %v726, %v724
    %v993 = vpack.c.b16 %v727, %v725
    %v994 = vpack.c.b16 %v730, %v728
    %v995 = vpack.c.b16 %v731, %v729
    %v996 = vpack.c.b16 %v734, %v732
    %v997 = vpack.c.b16 %v735, %v733
    %v998 = vpack.c.b16 %v738, %v736
    %v999 = vpack.c.b16 %v739, %v737
    %v1000 = vpack.c.b16 %v742, %v740
    %v1001 = vpack.c.b16 %v743, %v741
    %v1002 = vpack.c.b16 %v746, %v744
    %v1003 = vpack.c.b16 %v747, %v745
    %v1004 = vpack.c.b16 %v750, %v748
    %v1005 = vpack.c.b16 %v751, %v749
    %v1006 = vpack.c.b16 %v754, %v752
    %v1007 = vpack.c.b16 %v755, %v753
    %v1008 = vpack.c.b16 %v758, %v756
    %v1009 = vpack.c.b16 %v759, %v757
    %v1010 = vpack.c.b16 %v762, %v760
    %v1011 = vpack.c.b16 %v763, %v761
    %v1012 = vpack.c.b16 %v766, %v764
    %v1013 = vpack.c.b16 %v767, %v765
    %v1014 = vpack.c.b16 %v770, %v768
    %v1015 = vpack.c.b16 %v771, %v769
    %v1016 = vpack.c.b16 %v774, %v772
    %v1017 = vpack.c.b16 %v775, %v773
    %v1018 = vpack.c.b16 %v778, %v776
    %v1019 = vpack.c.b16 %v779, %v777
    %v1020 = vpack.c.b16 %v782, %v780
    %v1021 = vpack.c.b16 %v783, %v781
    %v1022 = vpack.c.b16 %v786, %v784
    %v1023 = vpack.c.b16 %v787, %v785
    %v1024 = vpack.c.b16 %v790, %v788
    %v1025 = vpack.c.b16 %v791, %v789
    %v1026 = vpack.c.b16 %v794, %v792
    %v1027 = vpack.c.b16 %v795, %v793
    %v1028 = vpack.c.b16 %v798, %v796
    %v1029 = vpack.c.b16 %v799, %v797
    %v1030 = vpack.c.b16 %v802, %v800
    %v1031 = vpack.c.b16 %v803, %v801
    %v1032 = vpack.c.b16 %v806, %v804
    %v1033 = vpack.c.b16 %v807, %v805
    %v1034 = vpack.c.b16 %v810, %v808
    %v1035 = vpack.c.b16 %v811, %v809
    %v1036 = vpack.c.b16 %v814, %v812
    %v1037 = vpack.c.b16 %v815, %v813
    %v1038 = vpack.c.b16 %v818, %v816
    %v1039 = vpack.c.b16 %v819, %v817
    %v1040 = vpack.c.b16 %v822, %v820
    %v1041 = vpack.c.b16 %v823, %v821
    %v1042 = vpack.c.b16 %v826, %v824
    %v1043 = vpack.c.b16 %v827, %v825
    %v1044 = vpack.c.b16 %v830, %v828
    %v1045 = vpack.c.b16 %v831, %v829
    %v1046 = vpack.c.b16 %v834, %v832
    %v1047 = vpack.c.b16 %v835, %v833
    %v1048 = vpack.c.b16 %v838, %v836
    %v1049 = vpack.c.b16 %v839, %v837
    %v1050 = vpack.c.b16 %v842, %v840
    %v1051 = vpack.c.b16 %v843, %v841
    %v1052 = vpack.c.b16 %v846, %v844
    %v1053 = vpack.c.b16 %v847, %v845
    %v1054 = vpack.c.b16 %v850, %v848
    %v1055 = vpack.c.b16 %v851, %v849
    %v1056 = vpack.c.b16 %v854, %v852
    %v1057 = vpack.c.b16 %v855, %v853
    %v1058 = vpack.c.b16 %v858, %v856
    %v1059 = vpack.c.b16 %v859, %v857
    %v1060 = vpack.c.b16 %v862, %v860
    %v1061 = vpack.c.b16 %v863, %v861
    %v1062 = vpack.c.b16 %v866, %v864
    %v1063 = vpack.c.b16 %v867, %v865
    %v1064 = vpack.c.b16 %v870, %v868
    %v1065 = vpack.c.b16 %v871, %v869
    %v1066 = vpack.c.b16 %v874, %v872
    %v1067 = vpack.c.b16 %v875, %v873
    %v1068 = vpack.c.b16 %v878, %v876
    %v1069 = vpack.c.b16 %v879, %v877
    %v1070 = vpack.c.b16 %v882, %v880
    %v1071 = vpack.c.b16 %v883, %v881
    %v1072 = vpack.c.b16 %v886, %v884
    %v1073 = vpack.c.b16 %v887, %v885
    %v1074 = vpack.c.b16 %v890, %v888
    %v1075 = vpack.c.b16 %v891, %v889
    %v1076 = vpack.c.b16 %v894, %v892
    %v1077 = vpack.c.b16 %v895, %v893
    %v1078 = vpack.c.b16 %v898, %v896
    %v1079 = vpack.c.b16 %v899, %v897
    %v1080 = vpack.c.b16 %v902, %v900
    %v1081 = vpack.c.b16 %v903, %v901
    %v1082 = vpack.c.b16 %v906, %v904
    %v1083 = vpack.c.b16 %v907, %v905
    %v1084 = vpack.c.b16 %v910, %v908
    %v1085 = vpack.c.b16 %v911, %v909
    %v1086 = vpack.c.b16 %v914, %v912
    %v1087 = vpack.c.b16 %v915, %v913
    %v1088 = vpack.c.b16 %v918, %v916
    %v1089 = vpack.c.b16 %v919, %v917
    %v1090 = vpack.c.b16 %v922, %v920
    %v1091 = vpack.c.b16 %v923, %v921
    %v1092 = vpack.c.b16 %v926, %v924
    %v1093 = vpack.c.b16 %v927, %v925
    %v1094 = vpack.c.b16 %v930, %v928
    %v1095 = vpack.c.b16 %v931, %v929
    %v1096 = vpack.c.b16 %v934, %v932
    %v1097 = vpack.c.b16 %v935, %v933
    %v1098 = vpack.c.b16 %v938, %v936
    %v1099 = vpack.c.b16 %v939, %v937
    %1260 = vmatpush.bf16.msra.mxu0 %v954
    %1261 = vmatpush.bf16.msra.mxu0 %v952
    %1262 = vmatpush.bf16.msra.mxu0 %v950
    %1263 = vmatpush.bf16.msra.mxu0 %v948
    %1264 = vmatpush.bf16.msra.mxu0 %v946
    %1265 = vmatpush.bf16.msra.mxu0 %v944
    %1266 = vmatpush.bf16.msra.mxu0 %v942
    %1267 = vmatpush.bf16.msra.mxu0 %v940
    %1268 = vmatmul.bf16.gmra.mxu0 %v284
    %v1269 = vpop.f32.mrf.mxu0
    %v1270 = vadd.f32 %v456, %v1269
    %v1271 = vpop.f32.mrf.mxu0
    %v1272 = vadd.f32 %v456, %v1271
    %1273 = vdwg.mxu0
    %1274 = vmatpush.bf16.msra.mxu0 %v970
    %1275 = vmatpush.bf16.msra.mxu0 %v968
    %1276 = vmatpush.bf16.msra.mxu0 %v966
    %1277 = vmatpush.bf16.msra.mxu0 %v964
    %1278 = vmatpush.bf16.msra.mxu0 %v962
    %1279 = vmatpush.bf16.msra.mxu0 %v960
    %1280 = vmatpush.bf16.msra.mxu0 %v958
    %1281 = vmatpush.bf16.msra.mxu0 %v956
    %1282 = vmatmul.bf16.gmra.mxu0 %v285
    %v1283 = vpop.f32.mrf.mxu0
    %v1284 = vadd.f32 %v1270, %v1283
    %v1285 = vpop.f32.mrf.mxu0
    %v1286 = vadd.f32 %v1272, %v1285
    %1287 = vdwg.mxu0
    %1288 = vmatpush.bf16.msra.mxu0 %v986
    %1289 = vmatpush.bf16.msra.mxu0 %v984
    %1290 = vmatpush.bf16.msra.mxu0 %v982
    %1291 = vmatpush.bf16.msra.mxu0 %v980
    %1292 = vmatpush.bf16.msra.mxu0 %v978
    %1293 = vmatpush.bf16.msra.mxu0 %v976
    %1294 = vmatpush.bf16.msra.mxu0 %v974
    %1295 = vmatpush.bf16.msra.mxu0 %v972
    %1296 = vmatmul.bf16.gmra.mxu0 %v286
    %v1297 = vpop.f32.mrf.mxu0
    %v1298 = vadd.f32 %v1284, %v1297
    %v1299 = vpop.f32.mrf.mxu0
    %v1300 = vadd.f32 %v1286, %v1299
    %1301 = vdwg.mxu0
    %1302 = vmatpush.bf16.msra.mxu0 %v1002
    %1303 = vmatpush.bf16.msra.mxu0 %v1000
    %1304 = vmatpush.bf16.msra.mxu0 %v998
    %1305 = vmatpush.bf16.msra.mxu0 %v996
    %1306 = vmatpush.bf16.msra.mxu0 %v994
    %1307 = vmatpush.bf16.msra.mxu0 %v992
    %1308 = vmatpush.bf16.msra.mxu0 %v990
    %1309 = vmatpush.bf16.msra.mxu0 %v988
    %1310 = vmatmul.bf16.gmra.mxu0 %v287
    %v1311 = vpop.f32.mrf.mxu0
    %v1312 = vadd.f32 %v1298, %v1311
    %v1313 = vpop.f32.mrf.mxu0
    %v1314 = vadd.f32 %v1300, %v1313
    %1315 = vdwg.mxu0
    %1316 = vmatpush.bf16.msra.mxu0 %v1018
    %1317 = vmatpush.bf16.msra.mxu0 %v1016
    %1318 = vmatpush.bf16.msra.mxu0 %v1014
    %1319 = vmatpush.bf16.msra.mxu0 %v1012
    %1320 = vmatpush.bf16.msra.mxu0 %v1010
    %1321 = vmatpush.bf16.msra.mxu0 %v1008
    %1322 = vmatpush.bf16.msra.mxu0 %v1006
    %1323 = vmatpush.bf16.msra.mxu0 %v1004
    %1324 = vmatmul.bf16.gmra.mxu0 %v288
    %v1325 = vpop.f32.mrf.mxu0
    %v1326 = vadd.f32 %v1312, %v1325
    %v1327 = vpop.f32.mrf.mxu0
    %v1328 = vadd.f32 %v1314, %v1327
    %1329 = vdwg.mxu0
    %1330 = vmatpush.bf16.msra.mxu0 %v1034
    %1331 = vmatpush.bf16.msra.mxu0 %v1032
    %1332 = vmatpush.bf16.msra.mxu0 %v1030
    %1333 = vmatpush.bf16.msra.mxu0 %v1028
    %1334 = vmatpush.bf16.msra.mxu0 %v1026
    %1335 = vmatpush.bf16.msra.mxu0 %v1024
    %1336 = vmatpush.bf16.msra.mxu0 %v1022
    %1337 = vmatpush.bf16.msra.mxu0 %v1020
    %1338 = vmatmul.bf16.gmra.mxu0 %v289
    %v1339 = vpop.f32.mrf.mxu0
    %v1340 = vadd.f32 %v1326, %v1339
    %v1341 = vpop.f32.mrf.mxu0
    %v1342 = vadd.f32 %v1328, %v1341
    %1343 = vdwg.mxu0
    %1344 = vmatpush.bf16.msra.mxu0 %v1050
    %1345 = vmatpush.bf16.msra.mxu0 %v1048
    %1346 = vmatpush.bf16.msra.mxu0 %v1046
    %1347 = vmatpush.bf16.msra.mxu0 %v1044
    %1348 = vmatpush.bf16.msra.mxu0 %v1042
    %1349 = vmatpush.bf16.msra.mxu0 %v1040
    %1350 = vmatpush.bf16.msra.mxu0 %v1038
    %1351 = vmatpush.bf16.msra.mxu0 %v1036
    %1352 = vmatmul.bf16.gmra.mxu0 %v290
    %v1353 = vpop.f32.mrf.mxu0
    %v1354 = vadd.f32 %v1340, %v1353
    %v1355 = vpop.f32.mrf.mxu0
    %v1356 = vadd.f32 %v1342, %v1355
    %1357 = vdwg.mxu0
    %1358 = vmatpush.bf16.msra.mxu0 %v1066
    %1359 = vmatpush.bf16.msra.mxu0 %v1064
    %1360 = vmatpush.bf16.msra.mxu0 %v1062
    %1361 = vmatpush.bf16.msra.mxu0 %v1060
    %1362 = vmatpush.bf16.msra.mxu0 %v1058
    %1363 = vmatpush.bf16.msra.mxu0 %v1056
    %1364 = vmatpush.bf16.msra.mxu0 %v1054
    %1365 = vmatpush.bf16.msra.mxu0 %v1052
    %1366 = vmatmul.bf16.gmra.mxu0 %v291
    %v1367 = vpop.f32.mrf.mxu0
    %v1368 = vadd.f32 %v1354, %v1367
    %v1369 = vpop.f32.mrf.mxu0
    %v1370 = vadd.f32 %v1356, %v1369
    %1371 = vdwg.mxu0
    %1372 = vmatpush.bf16.msra.mxu0 %v1082
    %1373 = vmatpush.bf16.msra.mxu0 %v1080
    %1374 = vmatpush.bf16.msra.mxu0 %v1078
    %1375 = vmatpush.bf16.msra.mxu0 %v1076
    %1376 = vmatpush.bf16.msra.mxu0 %v1074
    %1377 = vmatpush.bf16.msra.mxu0 %v1072
    %1378 = vmatpush.bf16.msra.mxu0 %v1070
    %1379 = vmatpush.bf16.msra.mxu0 %v1068
    %1380 = vmatmul.bf16.gmra.mxu0 %v292
    %v1381 = vpop.f32.mrf.mxu0
    %v1382 = vadd.f32 %v1368, %v1381
    %v1383 = vpop.f32.mrf.mxu0
    %v1384 = vadd.f32 %v1370, %v1383
    %1385 = vdwg.mxu0
    %1386 = vmatpush.bf16.msra.mxu0 %v1098
    %1387 = vmatpush.bf16.msra.mxu0 %v1096
    %1388 = vmatpush.bf16.msra.mxu0 %v1094
    %1389 = vmatpush.bf16.msra.mxu0 %v1092
    %1390 = vmatpush.bf16.msra.mxu0 %v1090
    %1391 = vmatpush.bf16.msra.mxu0 %v1088
    %1392 = vmatpush.bf16.msra.mxu0 %v1086
    %1393 = vmatpush.bf16.msra.mxu0 %v1084
    %1394 = vmatmul.bf16.gmra.mxu0 %v293
    %v1395 = vpop.f32.mrf.mxu0
    %v1396 = vadd.f32 %v1382, %v1395
    %v1397 = vpop.f32.mrf.mxu0
    %v1398 = vadd.f32 %v1384, %v1397
    %1399 = vdwg.mxu0
    %1400 = vmatpush.bf16.msra.mxu0 %v955
    %1401 = vmatpush.bf16.msra.mxu0 %v953
    %1402 = vmatpush.bf16.msra.mxu0 %v951
    %1403 = vmatpush.bf16.msra.mxu0 %v949
    %1404 = vmatpush.bf16.msra.mxu0 %v947
    %1405 = vmatpush.bf16.msra.mxu0 %v945
    %1406 = vmatpush.bf16.msra.mxu0 %v943
    %1407 = vmatpush.bf16.msra.mxu0 %v941
    %1408 = vmatmul.bf16.gmra.mxu0 %v284
    %v1409 = vpop.f32.mrf.mxu0
    %v1410 = vadd.f32 %v457, %v1409
    %v1411 = vpop.f32.mrf.mxu0
    %v1412 = vadd.f32 %v457, %v1411
    %1413 = vdwg.mxu0
    %1414 = vmatpush.bf16.msra.mxu0 %v971
    %1415 = vmatpush.bf16.msra.mxu0 %v969
    %1416 = vmatpush.bf16.msra.mxu0 %v967
    %1417 = vmatpush.bf16.msra.mxu0 %v965
    %1418 = vmatpush.bf16.msra.mxu0 %v963
    %1419 = vmatpush.bf16.msra.mxu0 %v961
    %1420 = vmatpush.bf16.msra.mxu0 %v959
    %1421 = vmatpush.bf16.msra.mxu0 %v957
    %1422 = vmatmul.bf16.gmra.mxu0 %v285
    %v1423 = vpop.f32.mrf.mxu0
    %v1424 = vadd.f32 %v1410, %v1423
    %v1425 = vpop.f32.mrf.mxu0
    %v1426 = vadd.f32 %v1412, %v1425
    %1427 = vdwg.mxu0
    %1428 = vmatpush.bf16.msra.mxu0 %v987
    %1429 = vmatpush.bf16.msra.mxu0 %v985
    %1430 = vmatpush.bf16.msra.mxu0 %v983
    %1431 = vmatpush.bf16.msra.mxu0 %v981
    %1432 = vmatpush.bf16.msra.mxu0 %v979
    %1433 = vmatpush.bf16.msra.mxu0 %v977
    %1434 = vmatpush.bf16.msra.mxu0 %v975
    %1435 = vmatpush.bf16.msra.mxu0 %v973
    %1436 = vmatmul.bf16.gmra.mxu0 %v286
    %v1437 = vpop.f32.mrf.mxu0
    %v1438 = vadd.f32 %v1424, %v1437
    %v1439 = vpop.f32.mrf.mxu0
    %v1440 = vadd.f32 %v1426, %v1439
    %1441 = vdwg.mxu0
    %1442 = vmatpush.bf16.msra.mxu0 %v1003
    %1443 = vmatpush.bf16.msra.mxu0 %v1001
    %1444 = vmatpush.bf16.msra.mxu0 %v999
    %1445 = vmatpush.bf16.msra.mxu0 %v997
    %1446 = vmatpush.bf16.msra.mxu0 %v995
    %1447 = vmatpush.bf16.msra.mxu0 %v993
    %1448 = vmatpush.bf16.msra.mxu0 %v991
    %1449 = vmatpush.bf16.msra.mxu0 %v989
    %1450 = vmatmul.bf16.gmra.mxu0 %v287
    %v1451 = vpop.f32.mrf.mxu0
    %v1452 = vadd.f32 %v1438, %v1451
    %v1453 = vpop.f32.mrf.mxu0
    %v1454 = vadd.f32 %v1440, %v1453
    %1455 = vdwg.mxu0
    %1456 = vmatpush.bf16.msra.mxu0 %v1019
    %1457 = vmatpush.bf16.msra.mxu0 %v1017
    %1458 = vmatpush.bf16.msra.mxu0 %v1015
    %1459 = vmatpush.bf16.msra.mxu0 %v1013
    %1460 = vmatpush.bf16.msra.mxu0 %v1011
    %1461 = vmatpush.bf16.msra.mxu0 %v1009
    %1462 = vmatpush.bf16.msra.mxu0 %v1007
    %1463 = vmatpush.bf16.msra.mxu0 %v1005
    %1464 = vmatmul.bf16.gmra.mxu0 %v288
    %v1465 = vpop.f32.mrf.mxu0
    %v1466 = vadd.f32 %v1452, %v1465
    %v1467 = vpop.f32.mrf.mxu0
    %v1468 = vadd.f32 %v1454, %v1467
    %1469 = vdwg.mxu0
    %1470 = vmatpush.bf16.msra.mxu0 %v1035
    %1471 = vmatpush.bf16.msra.mxu0 %v1033
    %1472 = vmatpush.bf16.msra.mxu0 %v1031
    %1473 = vmatpush.bf16.msra.mxu0 %v1029
    %1474 = vmatpush.bf16.msra.mxu0 %v1027
    %1475 = vmatpush.bf16.msra.mxu0 %v1025
    %1476 = vmatpush.bf16.msra.mxu0 %v1023
    %1477 = vmatpush.bf16.msra.mxu0 %v1021
    %1478 = vmatmul.bf16.gmra.mxu0 %v289
    %v1479 = vpop.f32.mrf.mxu0
    %v1480 = vadd.f32 %v1466, %v1479
    %v1481 = vpop.f32.mrf.mxu0
    %v1482 = vadd.f32 %v1468, %v1481
    %1483 = vdwg.mxu0
    %1484 = vmatpush.bf16.msra.mxu0 %v1051
    %1485 = vmatpush.bf16.msra.mxu0 %v1049
    %1486 = vmatpush.bf16.msra.mxu0 %v1047
    %1487 = vmatpush.bf16.msra.mxu0 %v1045
    %1488 = vmatpush.bf16.msra.mxu0 %v1043
    %1489 = vmatpush.bf16.msra.mxu0 %v1041
    %1490 = vmatpush.bf16.msra.mxu0 %v1039
    %1491 = vmatpush.bf16.msra.mxu0 %v1037
    %1492 = vmatmul.bf16.gmra.mxu0 %v290
    %v1493 = vpop.f32.mrf.mxu0
    %v1494 = vadd.f32 %v1480, %v1493
    %v1495 = vpop.f32.mrf.mxu0
    %v1496 = vadd.f32 %v1482, %v1495
    %1497 = vdwg.mxu0
    %1498 = vmatpush.bf16.msra.mxu0 %v1067
    %1499 = vmatpush.bf16.msra.mxu0 %v1065
    %1500 = vmatpush.bf16.msra.mxu0 %v1063
    %1501 = vmatpush.bf16.msra.mxu0 %v1061
    %1502 = vmatpush.bf16.msra.mxu0 %v1059
    %1503 = vmatpush.bf16.msra.mxu0 %v1057
    %1504 = vmatpush.bf16.msra.mxu0 %v1055
    %1505 = vmatpush.bf16.msra.mxu0 %v1053
    %1506 = vmatmul.bf16.gmra.mxu0 %v291
    %v1507 = vpop.f32.mrf.mxu0
    %v1508 = vadd.f32 %v1494, %v1507
    %v1509 = vpop.f32.mrf.mxu0
    %v1510 = vadd.f32 %v1496, %v1509
    %1511 = vdwg.mxu0
    %1512 = vmatpush.bf16.msra.mxu0 %v1083
    %1513 = vmatpush.bf16.msra.mxu0 %v1081
    %1514 = vmatpush.bf16.msra.mxu0 %v1079
    %1515 = vmatpush.bf16.msra.mxu0 %v1077
    %1516 = vmatpush.bf16.msra.mxu0 %v1075
    %1517 = vmatpush.bf16.msra.mxu0 %v1073
    %1518 = vmatpush.bf16.msra.mxu0 %v1071
    %1519 = vmatpush.bf16.msra.mxu0 %v1069
    %1520 = vmatmul.bf16.gmra.mxu0 %v292
    %v1521 = vpop.f32.mrf.mxu0
    %v1522 = vadd.f32 %v1508, %v1521
    %v1523 = vpop.f32.mrf.mxu0
    %v1524 = vadd.f32 %v1510, %v1523
    %1525 = vdwg.mxu0
    %1526 = vmatpush.bf16.msra.mxu0 %v1099
    %1527 = vmatpush.bf16.msra.mxu0 %v1097
    %1528 = vmatpush.bf16.msra.mxu0 %v1095
    %1529 = vmatpush.bf16.msra.mxu0 %v1093
    %1530 = vmatpush.bf16.msra.mxu0 %v1091
    %1531 = vmatpush.bf16.msra.mxu0 %v1089
    %1532 = vmatpush.bf16.msra.mxu0 %v1087
    %1533 = vmatpush.bf16.msra.mxu0 %v1085
    %1534 = vmatmul.bf16.gmra.mxu0 %v293
    %v1535 = vpop.f32.mrf.mxu0
    %v1536 = vadd.f32 %v1522, %v1535
    %v1537 = vpop.f32.mrf.mxu0
    %v1538 = vadd.f32 %v1524, %v1537
    %1539 = vdwg.mxu0
    %1540 = vst [vmem:[%s8] sm:$0xff] %v1396
    %1541 = vst [vmem:[%s8 + $0x8] sm:$0xff] %v1536
    %1542 = vst [vmem:[%s8 + $0x10] sm:$0xff] %v1398
    %1543 = vst [vmem:[%s8 + $0x18] sm:$0xff] %v1538
    %v1544 = vpack.c.bf16 %v1398, %v1396
    %v1545 = vpack.c.bf16 %v1538, %v1536
    %v1546 = vld [vmem:[%s5] sm:$0xf]
    %v1547 = vld [vmem:[%s5 + $0x4] sm:$0xf]
    %v1548 = vld [vmem:[%s5 + $0x8] sm:$0xf]
    %v1549 = vld [vmem:[%s5 + $0xc] sm:$0xf]
    %v1550 = vld [vmem:[%s5 + $0x10] sm:$0xf]
    %v1551 = vld [vmem:[%s5 + $0x14] sm:$0xf]
    %v1552 = vld [vmem:[%s5 + $0x18] sm:$0xf]
    %v1553 = vld [vmem:[%s5 + $0x1c] sm:$0xf]
    %v1554 = vld [vmem:[%s5 + $0x20] sm:$0xf]
    %v1555 = vld [vmem:[%s5 + $0x24] sm:$0xf]
    %v1556 = vld [vmem:[%s5 + $0x28] sm:$0xf]
    %v1557 = vld [vmem:[%s5 + $0x2c] sm:$0xf]
    %v1558 = vld [vmem:[%s5 + $0x30] sm:$0xf]
    %v1559 = vld [vmem:[%s5 + $0x34] sm:$0xf]
    %v1560 = vld [vmem:[%s5 + $0x38] sm:$0xf]
    %v1561 = vld [vmem:[%s5 + $0x3c] sm:$0xf]
    %v1562 = vld [vmem:[%s5 + $0x40] sm:$0xf]
    %v1563 = vld [vmem:[%s5 + $0x44] sm:$0xf]
    %v1564 = vld [vmem:[%s5 + $0x48] sm:$0xf]
    %v1565 = vld [vmem:[%s5 + $0x4c] sm:$0xf]
    %v1566 = vld [vmem:[%s5 + $0x50] sm:$0xf]
    %v1567 = vld [vmem:[%s5 + $0x54] sm:$0xf]
    %v1568 = vld [vmem:[%s5 + $0x58] sm:$0xf]
    %v1569 = vld [vmem:[%s5 + $0x5c] sm:$0xf]
    %v1570 = vld [vmem:[%s5 + $0x60] sm:$0xf]
    %v1571 = vld [vmem:[%s5 + $0x64] sm:$0xf]
    %v1572 = vld [vmem:[%s5 + $0x68] sm:$0xf]
    %v1573 = vld [vmem:[%s5 + $0x6c] sm:$0xf]
    %v1574 = vld [vmem:[%s5 + $0x70] sm:$0xf]
    %v1575 = vld [vmem:[%s5 + $0x74] sm:$0xf]
    %v1576 = vld [vmem:[%s5 + $0x78] sm:$0xf]
    %v1577 = vld [vmem:[%s5 + $0x7c] sm:$0xf]
    %v1578 = vld [vmem:[#allocation6] sm:$0x1]
    %v1580 = vperm.slane %v1578, 0
    %v1614 = vunpack.c.l.b16 %v1546
    %v1615 = vunpack.c.l.b16 %v1547
    %v1616 = vunpack.c.l.b16 %v1548
    %v1617 = vunpack.c.l.b16 %v1549
    %v1618 = vunpack.c.l.b16 %v1550
    %v1619 = vunpack.c.l.b16 %v1551
    %v1620 = vunpack.c.l.b16 %v1552
    %v1621 = vunpack.c.l.b16 %v1553
    %v1622 = vunpack.c.l.b16 %v1554
    %v1623 = vunpack.c.l.b16 %v1555
    %v1624 = vunpack.c.l.b16 %v1556
    %v1625 = vunpack.c.l.b16 %v1557
    %v1626 = vunpack.c.l.b16 %v1558
    %v1627 = vunpack.c.l.b16 %v1559
    %v1628 = vunpack.c.l.b16 %v1560
    %v1629 = vunpack.c.l.b16 %v1561
    %v1630 = vunpack.c.l.b16 %v1562
    %v1631 = vunpack.c.l.b16 %v1563
    %v1632 = vunpack.c.l.b16 %v1564
    %v1633 = vunpack.c.l.b16 %v1565
    %v1634 = vunpack.c.l.b16 %v1566
    %v1635 = vunpack.c.l.b16 %v1567
    %v1636 = vunpack.c.l.b16 %v1568
    %v1637 = vunpack.c.l.b16 %v1569
    %v1638 = vunpack.c.l.b16 %v1570
    %v1639 = vunpack.c.l.b16 %v1571
    %v1640 = vunpack.c.l.b16 %v1572
    %v1641 = vunpack.c.l.b16 %v1573
    %v1642 = vunpack.c.l.b16 %v1574
    %v1643 = vunpack.c.l.b16 %v1575
    %v1644 = vunpack.c.l.b16 %v1576
    %v1645 = vunpack.c.l.b16 %v1577
    %v1646 = vpack.c.b16 %v1615, %v1614
    %v1647 = vpack.c.b16 %v1617, %v1616
    %v1648 = vpack.c.b16 %v1619, %v1618
    %v1649 = vpack.c.b16 %v1621, %v1620
    %v1650 = vpack.c.b16 %v1623, %v1622
    %v1651 = vpack.c.b16 %v1625, %v1624
    %v1652 = vpack.c.b16 %v1627, %v1626
    %v1653 = vpack.c.b16 %v1629, %v1628
    %v1654 = vpack.c.b16 %v1631, %v1630
    %v1655 = vpack.c.b16 %v1633, %v1632
    %v1656 = vpack.c.b16 %v1635, %v1634
    %v1657 = vpack.c.b16 %v1637, %v1636
    %v1658 = vpack.c.b16 %v1639, %v1638
    %v1659 = vpack.c.b16 %v1641, %v1640
    %v1660 = vpack.c.b16 %v1643, %v1642
    %v1661 = vpack.c.b16 %v1645, %v1644
    %1678 = vmatpush.bf16.msra.mxu0 %v1653
    %1679 = vmatpush.bf16.msra.mxu0 %v1652
    %1680 = vmatpush.bf16.msra.mxu0 %v1651
    %1681 = vmatpush.bf16.msra.mxu0 %v1650
    %1682 = vmatpush.bf16.msra.mxu0 %v1649
    %1683 = vmatpush.bf16.msra.mxu0 %v1648
    %1684 = vmatpush.bf16.msra.mxu0 %v1647
    %1685 = vmatpush.bf16.msra.mxu0 %v1646
    %1686 = vmatmul.bf16.gmra.mxu0 %v1544
    %v1687 = vpop.f32.mrf.mxu0
    %v1688 = vadd.f32 %v1580, %v1687
    %v1689 = vpop.f32.mrf.mxu0
    %v1690 = vadd.f32 %v1580, %v1689
    %1691 = vdwg.mxu0
    %1692 = vmatpush.bf16.msra.mxu0 %v1661
    %1693 = vmatpush.bf16.msra.mxu0 %v1660
    %1694 = vmatpush.bf16.msra.mxu0 %v1659
    %1695 = vmatpush.bf16.msra.mxu0 %v1658
    %1696 = vmatpush.bf16.msra.mxu0 %v1657
    %1697 = vmatpush.bf16.msra.mxu0 %v1656
    %1698 = vmatpush.bf16.msra.mxu0 %v1655
    %1699 = vmatpush.bf16.msra.mxu0 %v1654
    %1700 = vmatmul.bf16.gmra.mxu0 %v1545
    %v1701 = vpop.f32.mrf.mxu0
    %v1702 = vadd.f32 %v1688, %v1701
    %v1703 = vpop.f32.mrf.mxu0
    %v1704 = vadd.f32 %v1690, %v1703
    %1705 = vdwg.mxu0
    %1706 = vst [vmem:[%s7] sm:$0xff] %v1702
    %1707 = vst [vmem:[%s7 + $0x8] sm:$0xff] %v1704
    // Predicated region
    $region42: #{effnetv2_forward.1} parent=1 // pred_check
      _
    $region43: #{effnetv2_forward.1} parent=1 // pred_check_branch
      %1709 = sbr.rel (0) target = $region45
    $region44: #{effnetv2_forward.1} parent=1 // pred_region
      _
    $region45: #{effnetv2_forward.1} parent=1 // pred_fallthru
      _
    // Predicated region
    $region46: #{effnetv2_forward.1} parent=1 // pred_check
      _
    $region47: #{effnetv2_forward.1} parent=1 // pred_check_branch
      %1711 = sbr.rel (0) target = $region49
    $region48: #{effnetv2_forward.1} parent=1 // pred_region
      _
    $region49: #{effnetv2_forward.1} parent=1 // pred_fallthru
      _
    // Predicated region
    $region50: #{effnetv2_forward.1} parent=1 // pred_check
      _
    $region51: #{effnetv2_forward.1} parent=1 // pred_check_branch
      %1713 = sbr.rel (0) target = $region53
    $region52: #{effnetv2_forward.1} parent=1 // pred_region
      _
    $region53: #{effnetv2_forward.1} parent=1 // pred_fallthru
      _
    // Predicated region
    $region54: #{effnetv2_forward.1} parent=1 // pred_check
      _
    $region55: #{effnetv2_forward.1} parent=1 // pred_check_branch
      %1715 = sbr.rel (0) target = $region57
    $region56: #{effnetv2_forward.1} parent=1 // pred_region
      _
    $region57: #{effnetv2_forward.1} parent=1 // pred_fallthru
      _
    %1716 = vsyncpa [#allocation3], 1
    %1717 = vsyncpa [#allocation5], 1

</llo_original>
